<compile_context>
chip_gen: v7x
topology: tpu7x:2x2x1
jax: 0.10.0
libtpu: 0.0.40
codegen_flags: <defaults>
</compile_context>

<pallas_src>
import math

import jax
import jax.numpy as jnp
from jax import lax
from jax.experimental import pallas as pl
from jax.experimental.pallas import tpu as pltpu

# ---- problem sizes (small, consistent with the module) ----------------------
B, C, T = 2, 16, 32              # batch, num_channels, time
RED = 2                          # reduction_ratio
C_RED = C // RED
KERSIZE = (3, 5, 10)             # kernel sizes of the three Conv_Attention_Blocks
TPS = tuple(T - k + 1 for k in KERSIZE)   # valid conv lengths: (30, 28, 23)
C3 = 3 * C                       # stacked channel rows of the three branches
MAXK = max(KERSIZE)
AUG = C3 + 8                     # activation rows padded to an 8-sublane multiple
BT = B * T                       # batch packed along the lane (time) axis
TSHIFT = T.bit_length() - 1
assert T & (T - 1) == 0, "T must be a power of two for the lane/block index math"
FC_COLS = C3 + 2 + C_RED         # [ W1@cat_mat | b1' | W2 | b2 ]


# ------------------------------ Pallas kernel --------------------------------
def se_kernel(x_ref, wqkv_ref, wout_ref, cw_ref, fc_ref, out_ref):
    """Single-invocation fused forward pass for the whole (batch-packed) input.

    x_ref   : (C, B*T)      f32, x_packed[c, b*T + t] = x[b, c, t]
    wqkv_ref: (3*C3, AUG)   bf16 block-diagonal [Wq;Wk;Wv] per branch; column
                            C3+i carries (Wqkv_i @ conv_bias_i + qkv_bias_i),
                            gated in-kernel by branch i's valid-time mask row.
    wout_ref: (C3, AUG)     bf16 block-diagonal Wout per branch; column C3
                            carries the out-projection biases (gated by a
                            ones row).
    cw_ref  : (C3, MAXK)    f32 depthwise conv weights, branch i in rows
                            [C*i, C*(i+1)).
    fc_ref  : (C, FC_COLS)  f32 [ W1@cat_mat | b1+bcat*W1@1 | W2 | b2 ]
    out_ref : (C, B*T)      f32
    """
    f32, bf16 = jnp.float32, jnp.bfloat16

    x = x_ref[...]                                               # (C, BT) f32

    # ---- structured constants (hoisted; traced once) -------------------------
    lane = lax.broadcasted_iota(jnp.int32, (1, BT), 1)
    t_in = jnp.bitwise_and(lane, T - 1)                          # time within batch block
    masks = [(t_in < tp).astype(f32) for tp in TPS]              # 3 x (1, BT)
    mask_blk = jnp.concatenate(masks + [jnp.zeros((5, BT), f32)], axis=0)   # (8, BT)
    ones_blk = jnp.concatenate(
        [jnp.ones((1, BT), f32), jnp.zeros((7, BT), f32)], axis=0)          # (8, BT)
    pool_w = jnp.concatenate(
        [jnp.broadcast_to(m * (1.0 / tp), (C, BT)) for m, tp in zip(masks, TPS)],
        axis=0)                                                  # (C3, BT) masked-mean weights

    r2 = lax.broadcasted_iota(jnp.int32, (BT, BT), 0)
    c2 = lax.broadcasted_iota(jnp.int32, (BT, BT), 1)
    blk_diag = (jnp.right_shift(r2, TSHIFT)
                == jnp.right_shift(c2, TSHIFT)).astype(f32)      # (BT, BT) batch-block diag
    rs = lax.broadcasted_iota(jnp.int32, (BT, B), 0)
    cs = lax.broadcasted_iota(jnp.int32, (BT, B), 1)
    sum_sel = (jnp.right_shift(rs, TSHIFT) == cs).astype(f32)    # (BT, B) per-batch sum
    rg = lax.broadcasted_iota(jnp.int32, (B, BT), 0)
    cg = lax.broadcasted_iota(jnp.int32, (B, BT), 1)
    exp_sel = (rg == jnp.right_shift(cg, TSHIFT)).astype(f32)    # (B, BT) gate expansion

    # ---- depthwise conv: MAXK lane shifts shared across branches & batch -----
    cw = cw_ref[...]                                             # (C3, MAXK) f32
    x_ext = jnp.concatenate([x, jnp.zeros((C, MAXK), f32)], axis=1)
    shifts = [x_ext[:, j:j + BT] for j in range(MAXK)]           # shifts[j][:, t] = x[:, t+j]
    conv_rows = []
    for i, ks in enumerate(KERSIZE):
        cwi = cw[C * i:C * (i + 1)]
        acc = cwi[:, 0:1] * shifts[0]
        for j in range(1, ks):
            acc = acc + cwi[:, j:j + 1] * shifts[j]
        # Exact zeros beyond each branch's valid time (and beyond each batch
        # block) so V is exactly zero there after the QKV matmul.
        conv_rows.append(acc * masks[i])
    conv_aug = jnp.concatenate(conv_rows + [mask_blk], axis=0)   # (AUG, BT)

    # ---- Q/K/V of all branches, all batch columns, in one bf16 matmul --------
    qkv = jnp.dot(wqkv_ref[...], conv_aug.astype(bf16),
                  preferred_element_type=f32)                    # (3*C3, BT) f32
    qkv_bf = qkv.astype(bf16)

    # ---- per-branch sigmoid self-attention, batch packed on lanes -------------
    scale = 1.0 / math.sqrt(C)
    att_rows = []
    for i in range(3):
        r0 = 3 * C * i
        q = qkv_bf[r0:r0 + C]                                    # (C, BT)
        k = qkv_bf[r0 + C:r0 + 2 * C]                            # (C, BT)
        v = qkv_bf[r0 + 2 * C:r0 + 3 * C]                        # (C, BT), 0 at pad
        scores_t = jax.nn.sigmoid(
            lax.dot_general(k, q, dimension_numbers=(((0,), (0,)), ((), ())),
                            preferred_element_type=f32) * scale)  # (BT, BT) = K^T Q
        scores_t = (scores_t * blk_diag).astype(bf16)             # kill cross-batch blocks
        att_rows.append(jnp.dot(v, scores_t, preferred_element_type=f32))   # (C, BT)
    # Padded-time columns of att are garbage (sigmoid(0)=0.5 paths) but are
    # excluded by the masked pooling below — do not read them elsewhere.
    att_aug = jnp.concatenate(att_rows + [ones_blk], axis=0)     # (AUG, BT)

    # ---- fused output projections + masked-mean pooling over valid time ------
    o = jnp.dot(wout_ref[...], att_aug.astype(bf16),
                preferred_element_type=f32)                      # (C3, BT)
    feats = jnp.maximum(
        jnp.dot(o * pool_w, sum_sel, preferred_element_type=f32), 0.0)   # (C3, B)

    # ---- squeeze-excite MLP (feature_concate_fc folded into fc1) -------------
    fc = fc_ref[...]
    w1c = fc[:C_RED, :C3]                                        # (C_RED, C3)
    b1 = fc[:C_RED, C3:C3 + 1]                                   # (C_RED, 1)
    w2 = fc[:, C3 + 1:C3 + 1 + C_RED]                            # (C, C_RED)
    b2 = fc[:, C3 + 1 + C_RED:C3 + 2 + C_RED]                    # (C, 1)
    h = jnp.maximum(jnp.dot(w1c, feats, preferred_element_type=f32) + b1, 0.0)
    g = jax.nn.sigmoid(jnp.dot(w2, h, preferred_element_type=f32) + b2)   # (C, B)

    # ---- channel gate and a single lane-dense store ----------------------------
    gate = jnp.dot(g, exp_sel, preferred_element_type=f32)       # (C, BT)
    out_ref[...] = x * gate


# ------------------------- host-side weight packing ---------------------------
def pack_params(p):
    hi = lax.Precision.HIGHEST
    wqkv = jnp.zeros((3 * C3, AUG), jnp.float32)
    wout = jnp.zeros((C3, AUG), jnp.float32)
    cw_pack = jnp.zeros((C3, MAXK), jnp.float32)
    for i, name in enumerate(("s", "m", "l")):
        aW, aB = p[f"aW_{name}"], p[f"aB_{name}"]          # (4,C,C), (4,C,1)
        cwv, cbv = p[f"cw_{name}"], p[f"cb_{name}"]        # (C,k),   (C,1)
        wq = jnp.concatenate([aW[0], aW[1], aW[2]], axis=0)   # (3C, C): [Wq;Wk;Wv]
        bq = jnp.concatenate([aB[0], aB[1], aB[2]], axis=0)   # (3C, 1)
        r0, c0 = 3 * C * i, C * i
        wqkv = wqkv.at[r0:r0 + 3 * C, c0:c0 + C].set(wq)
        # bias-injection column (gated in-kernel by that branch's valid-time mask):
        wqkv = wqkv.at[r0:r0 + 3 * C, C3 + i].set(
            (jnp.dot(wq, cbv, precision=hi) + bq)[:, 0])
        wout = wout.at[C * i:C * (i + 1), c0:c0 + C].set(aW[3])
        wout = wout.at[C * i:C * (i + 1), C3].set(aB[3][:, 0])   # gated by ones row
        cw_pack = cw_pack.at[C * i:C * (i + 1), :cwv.shape[1]].set(cwv)

    # feature_concate_fc folded into fc1:
    #   squeeze = sum_i wcat[i]*relu(pool_i) + bcat
    #   h = relu(W1 @ squeeze + b1) = relu((W1 @ cat_mat) @ relu_pooled + b1 + bcat*W1@1)
    cat_mat = jnp.zeros((C, C3), jnp.float32)
    for i in range(3):
        cat_mat = cat_mat.at[jnp.arange(C), C * i + jnp.arange(C)].set(p["wcat"][i])
    w1c = jnp.dot(p["w1"], cat_mat, precision=hi)              # (C_RED, C3)
    b1f = p["b1"][:, 0] + p["bcat"][0] * jnp.sum(p["w1"], axis=1)

    fc = jnp.zeros((C, FC_COLS), jnp.float32)
    fc = fc.at[:C_RED, :C3].set(w1c)
    fc = fc.at[:C_RED, C3].set(b1f)
    fc = fc.at[:, C3 + 1:C3 + 1 + C_RED].set(p["w2"])
    fc = fc.at[:, C3 + 1 + C_RED].set(p["b2"][:, 0])

    # MXU-feeding weight slabs shipped in bf16 (f32 accumulate inside the kernel).
    return wqkv.astype(jnp.bfloat16), wout.astype(jnp.bfloat16), cw_pack, fc


# ------------------------------ host wrapper ----------------------------------
def se_layer(x, p):
    wqkv, wout, cw_pack, fc = pack_params(p)
    # Batch packed onto the lane (time) axis: every shared-weight matmul and the
    # final store see one lane-dense (C, B*T) slab; single grid-less launch
    # (no megacore split of a microscopic batch).
    x_packed = jnp.transpose(x, (1, 0, 2)).reshape(C, BT)
    vmem = pl.BlockSpec(memory_space=pltpu.MemorySpace.VMEM)
    out_packed = pl.pallas_call(
        se_kernel,
        out_shape=jax.ShapeDtypeStruct((C, BT), jnp.float32),
        in_specs=[vmem, vmem, vmem, vmem, vmem],
        out_specs=vmem,
        input_output_aliases={0: 0},        # out = x * gate reuses x's HBM buffer
    )(x_packed, wqkv, wout, cw_pack, fc)
    return jnp.transpose(out_packed.reshape(C, B, T), (1, 0, 2))


# ------------------------- deterministic parameter init -----------------------
def init_params(key):
    keys = iter(jax.random.split(key, 18))

    def nrm(shape, scale=0.1):
        return jax.random.normal(next(keys), shape, jnp.float32) * scale

    p = {}
    for name, ksz in zip(("s", "m", "l"), KERSIZE):
        p[f"cw_{name}"] = nrm((C, ksz))          # Conv1d(C, C, ksz, groups=C) weight
        p[f"cb_{name}"] = nrm((C, 1))            # Conv1d bias
        p[f"aW_{name}"] = nrm((4, C, C))         # [Wq, Wk, Wv, Wout]
        p[f"aB_{name}"] = nrm((4, C, 1))         # [bq, bk, bv, bout]
    p["wcat"] = nrm((3,))                        # feature_concate_fc weight (1,3)
    p["bcat"] = nrm((1,))                        # feature_concate_fc bias
    p["w1"] = nrm((C_RED, C))                    # fc1
    p["b1"] = nrm((C_RED, 1))
    p["w2"] = nrm((C, C_RED))                    # fc2
    p["b2"] = nrm((C, 1))
    return p


# ------------------------------ pure-JAX reference ----------------------------
def reference(x, p):
    with jax.default_matmul_precision("highest"):
        feats = []
        for name, ksz in zip(("s", "m", "l"), KERSIZE):
            cw, cb = p[f"cw_{name}"], p[f"cb_{name}"]
            aW, aB = p[f"aW_{name}"], p[f"aB_{name}"]
            tp = T - ksz + 1
            conv = jnp.zeros((B, C, tp), jnp.float32)
            for j in range(ksz):
                conv = conv + cw[None, :, j:j + 1] * x[:, :, j:j + tp]
            conv = conv + cb[None]
            xt = jnp.transpose(conv, (0, 2, 1))                      # (B, tp, C)
            q = xt @ aW[0].T + aB[0][:, 0]
            k = xt @ aW[1].T + aB[1][:, 0]
            v = xt @ aW[2].T + aB[2][:, 0]
            scores = jax.nn.sigmoid(q @ jnp.transpose(k, (0, 2, 1)) / math.sqrt(C))
            o = (scores @ v) @ aW[3].T + aB[3][:, 0]
            feats.append(jax.nn.relu(jnp.mean(o, axis=1)))           # (B, C)
        squeeze = (feats[0] * p["wcat"][0] + feats[1] * p["wcat"][1]
                   + feats[2] * p["wcat"][2] + p["bcat"][0])
        h = jax.nn.relu(squeeze @ p["w1"].T + p["b1"][:, 0])
        g = jax.nn.sigmoid(h @ p["w2"].T + p["b2"][:, 0])
        return x * g[:, :, None]


# ----------------------------------- main --------------------------------------
if __name__ == "__main__":
    key = jax.random.PRNGKey(0)
    k_x, k_p = jax.random.split(key)
    x = jax.random.normal(k_x, (B, C, T), jnp.float32)
    params = init_params(k_p)

    out = se_layer(x, params)
    out = jax.block_until_ready(out)

    ref = jax.block_until_ready(reference(x, params))
    assert out.shape == (B, C, T)
    assert jnp.allclose(out, ref, rtol=1e-2, atol=1e-2), (
        f"max abs diff = {float(jnp.max(jnp.abs(out - ref)))}")

    print("KERNEL_OK")
</pallas_src>

<mosaic_0001>
module attributes {stable_mosaic.version = 11 : i64} {
  func.func @se_kernel(%arg0: memref<16x64xf32, #tpu.memory_space<vmem>>, %arg1: memref<144x56xbf16, #tpu.memory_space<vmem>>, %arg2: memref<48x56xbf16, #tpu.memory_space<vmem>>, %arg3: memref<48x10xf32, #tpu.memory_space<vmem>>, %arg4: memref<16x58xf32, #tpu.memory_space<vmem>>, %arg5: memref<16x64xf32, #tpu.memory_space<vmem>>) attributes {dimension_semantics = [], scalar_prefetch = 0 : i64, scratch_operands = 0 : i64, tpu.core_type = #tpu.core_type<tc>} {
    %c0 = arith.constant 0 : index
    %c0_0 = arith.constant 0 : index
    %0 = vector.load %arg0[%c0, %c0_0] : memref<16x64xf32, #tpu.memory_space<vmem>>, vector<16x64xf32>
    %1 = tpu.iota {dimensions = array<i32: 1>} : vector<1x64xi32>
    %c31_i32 = arith.constant 31 : i32
    %2 = vector.broadcast %c31_i32 : i32 to vector<1x64xi32>
    %3 = arith.andi %1, %2 : vector<1x64xi32>
    %c30_i32 = arith.constant 30 : i32
    %4 = vector.broadcast %c30_i32 : i32 to vector<1x64xi32>
    %5 = arith.cmpi slt, %3, %4 : vector<1x64xi32>
    %6 = arith.extui %5 : vector<1x64xi1> to vector<1x64xi32>
    %7 = arith.sitofp %6 : vector<1x64xi32> to vector<1x64xf32>
    %c28_i32 = arith.constant 28 : i32
    %8 = vector.broadcast %c28_i32 : i32 to vector<1x64xi32>
    %9 = arith.cmpi slt, %3, %8 : vector<1x64xi32>
    %10 = arith.extui %9 : vector<1x64xi1> to vector<1x64xi32>
    %11 = arith.sitofp %10 : vector<1x64xi32> to vector<1x64xf32>
    %c23_i32 = arith.constant 23 : i32
    %12 = vector.broadcast %c23_i32 : i32 to vector<1x64xi32>
    %13 = arith.cmpi slt, %3, %12 : vector<1x64xi32>
    %14 = arith.extui %13 : vector<1x64xi1> to vector<1x64xi32>
    %15 = arith.sitofp %14 : vector<1x64xi32> to vector<1x64xf32>
    %cst = arith.constant 0.000000e+00 : f32
    %16 = vector.broadcast %cst : f32 to vector<5x64xf32>
    %17 = tpu.concatenate %7, %11, %15, %16 in 0 : vector<1x64xf32>, vector<1x64xf32>, vector<1x64xf32>, vector<5x64xf32> -> vector<8x64xf32>
    %cst_1 = arith.constant 1.000000e+00 : f32
    %18 = vector.broadcast %cst_1 : f32 to vector<1x64xf32>
    %cst_2 = arith.constant 0.000000e+00 : f32
    %19 = vector.broadcast %cst_2 : f32 to vector<7x64xf32>
    %20 = tpu.concatenate %18, %19 in 0 : vector<1x64xf32>, vector<7x64xf32> -> vector<8x64xf32>
    %cst_3 = arith.constant 0.0333333351 : f32
    %21 = vector.broadcast %cst_3 : f32 to vector<1x64xf32>
    %22 = arith.mulf %7, %21 : vector<1x64xf32>
    %23 = vector.shape_cast %22 : vector<1x64xf32> to vector<1x64xf32>
    %24 = vector.broadcast %23 : vector<1x64xf32> to vector<16x64xf32>
    %cst_4 = arith.constant 0.0357142873 : f32
    %25 = vector.broadcast %cst_4 : f32 to vector<1x64xf32>
    %26 = arith.mulf %11, %25 : vector<1x64xf32>
    %27 = vector.shape_cast %26 : vector<1x64xf32> to vector<1x64xf32>
    %28 = vector.broadcast %27 : vector<1x64xf32> to vector<16x64xf32>
    %cst_5 = arith.constant 0.0434782617 : f32
    %29 = vector.broadcast %cst_5 : f32 to vector<1x64xf32>
    %30 = arith.mulf %15, %29 : vector<1x64xf32>
    %31 = vector.shape_cast %30 : vector<1x64xf32> to vector<1x64xf32>
    %32 = vector.broadcast %31 : vector<1x64xf32> to vector<16x64xf32>
    %33 = tpu.concatenate %24, %28, %32 in 0 : vector<16x64xf32>, vector<16x64xf32>, vector<16x64xf32> -> vector<48x64xf32>
    %34 = tpu.iota {dimensions = array<i32: 0>} : vector<64x64xi32>
    %35 = tpu.iota {dimensions = array<i32: 1>} : vector<64x64xi32>
    %c5_i32 = arith.constant 5 : i32
    %36 = vector.broadcast %c5_i32 : i32 to vector<64x64xi32>
    %37 = arith.shrsi %34, %36 : vector<64x64xi32>
    %c5_i32_6 = arith.constant 5 : i32
    %38 = vector.broadcast %c5_i32_6 : i32 to vector<64x64xi32>
    %39 = arith.shrsi %35, %38 : vector<64x64xi32>
    %40 = arith.cmpi eq, %37, %39 : vector<64x64xi32>
    %41 = arith.extui %40 : vector<64x64xi1> to vector<64x64xi32>
    %42 = arith.sitofp %41 : vector<64x64xi32> to vector<64x64xf32>
    %43 = tpu.iota {dimensions = array<i32: 0>} : vector<64x2xi32>
    %44 = tpu.iota {dimensions = array<i32: 1>} : vector<64x2xi32>
    %c5_i32_7 = arith.constant 5 : i32
    %45 = vector.broadcast %c5_i32_7 : i32 to vector<64x2xi32>
    %46 = arith.shrsi %43, %45 : vector<64x2xi32>
    %47 = arith.cmpi eq, %46, %44 : vector<64x2xi32>
    %48 = arith.extui %47 : vector<64x2xi1> to vector<64x2xi32>
    %49 = arith.sitofp %48 : vector<64x2xi32> to vector<64x2xf32>
    %50 = tpu.iota {dimensions = array<i32: 0>} : vector<2x64xi32>
    %51 = tpu.iota {dimensions = array<i32: 1>} : vector<2x64xi32>
    %c5_i32_8 = arith.constant 5 : i32
    %52 = vector.broadcast %c5_i32_8 : i32 to vector<2x64xi32>
    %53 = arith.shrsi %51, %52 : vector<2x64xi32>
    %54 = arith.cmpi eq, %50, %53 : vector<2x64xi32>
    %55 = arith.extui %54 : vector<2x64xi1> to vector<2x64xi32>
    %56 = arith.sitofp %55 : vector<2x64xi32> to vector<2x64xf32>
    %c0_9 = arith.constant 0 : index
    %c0_10 = arith.constant 0 : index
    %57 = vector.load %arg3[%c0_9, %c0_10] : memref<48x10xf32, #tpu.memory_space<vmem>>, vector<48x10xf32>
    %cst_11 = arith.constant 0.000000e+00 : f32
    %58 = vector.broadcast %cst_11 : f32 to vector<16x10xf32>
    %59 = tpu.concatenate %0, %58 in 1 : vector<16x64xf32>, vector<16x10xf32> -> vector<16x74xf32>
    %60 = vector.extract_strided_slice %59 {offsets = [0, 0], sizes = [16, 64], strides = [1, 1]} : vector<16x74xf32> to vector<16x64xf32>
    %61 = vector.extract_strided_slice %59 {offsets = [0, 1], sizes = [16, 64], strides = [1, 1]} : vector<16x74xf32> to vector<16x64xf32>
    %62 = vector.extract_strided_slice %59 {offsets = [0, 2], sizes = [16, 64], strides = [1, 1]} : vector<16x74xf32> to vector<16x64xf32>
    %63 = vector.extract_strided_slice %59 {offsets = [0, 3], sizes = [16, 64], strides = [1, 1]} : vector<16x74xf32> to vector<16x64xf32>
    %64 = vector.extract_strided_slice %59 {offsets = [0, 4], sizes = [16, 64], strides = [1, 1]} : vector<16x74xf32> to vector<16x64xf32>
    %65 = vector.extract_strided_slice %59 {offsets = [0, 5], sizes = [16, 64], strides = [1, 1]} : vector<16x74xf32> to vector<16x64xf32>
    %66 = vector.extract_strided_slice %59 {offsets = [0, 6], sizes = [16, 64], strides = [1, 1]} : vector<16x74xf32> to vector<16x64xf32>
    %67 = vector.extract_strided_slice %59 {offsets = [0, 7], sizes = [16, 64], strides = [1, 1]} : vector<16x74xf32> to vector<16x64xf32>
    %68 = vector.extract_strided_slice %59 {offsets = [0, 8], sizes = [16, 64], strides = [1, 1]} : vector<16x74xf32> to vector<16x64xf32>
    %69 = vector.extract_strided_slice %59 {offsets = [0, 9], sizes = [16, 64], strides = [1, 1]} : vector<16x74xf32> to vector<16x64xf32>
    %70 = vector.extract_strided_slice %57 {offsets = [0, 0], sizes = [16, 10], strides = [1, 1]} : vector<48x10xf32> to vector<16x10xf32>
    %71 = vector.extract_strided_slice %70 {offsets = [0, 0], sizes = [16, 1], strides = [1, 1]} : vector<16x10xf32> to vector<16x1xf32>
    %72 = vector.broadcast %71 : vector<16x1xf32> to vector<16x64xf32>
    %73 = arith.mulf %72, %60 : vector<16x64xf32>
    %74 = vector.extract_strided_slice %70 {offsets = [0, 1], sizes = [16, 1], strides = [1, 1]} : vector<16x10xf32> to vector<16x1xf32>
    %75 = vector.broadcast %74 : vector<16x1xf32> to vector<16x64xf32>
    %76 = arith.mulf %75, %61 : vector<16x64xf32>
    %77 = arith.addf %73, %76 : vector<16x64xf32>
    %78 = vector.extract_strided_slice %70 {offsets = [0, 2], sizes = [16, 1], strides = [1, 1]} : vector<16x10xf32> to vector<16x1xf32>
    %79 = vector.broadcast %78 : vector<16x1xf32> to vector<16x64xf32>
    %80 = arith.mulf %79, %62 : vector<16x64xf32>
    %81 = arith.addf %77, %80 : vector<16x64xf32>
    %82 = vector.broadcast %7 : vector<1x64xf32> to vector<16x64xf32>
    %83 = arith.mulf %81, %82 : vector<16x64xf32>
    %84 = vector.extract_strided_slice %57 {offsets = [16, 0], sizes = [16, 10], strides = [1, 1]} : vector<48x10xf32> to vector<16x10xf32>
    %85 = vector.extract_strided_slice %84 {offsets = [0, 0], sizes = [16, 1], strides = [1, 1]} : vector<16x10xf32> to vector<16x1xf32>
    %86 = vector.broadcast %85 : vector<16x1xf32> to vector<16x64xf32>
    %87 = arith.mulf %86, %60 : vector<16x64xf32>
    %88 = vector.extract_strided_slice %84 {offsets = [0, 1], sizes = [16, 1], strides = [1, 1]} : vector<16x10xf32> to vector<16x1xf32>
    %89 = vector.broadcast %88 : vector<16x1xf32> to vector<16x64xf32>
    %90 = arith.mulf %89, %61 : vector<16x64xf32>
    %91 = arith.addf %87, %90 : vector<16x64xf32>
    %92 = vector.extract_strided_slice %84 {offsets = [0, 2], sizes = [16, 1], strides = [1, 1]} : vector<16x10xf32> to vector<16x1xf32>
    %93 = vector.broadcast %92 : vector<16x1xf32> to vector<16x64xf32>
    %94 = arith.mulf %93, %62 : vector<16x64xf32>
    %95 = arith.addf %91, %94 : vector<16x64xf32>
    %96 = vector.extract_strided_slice %84 {offsets = [0, 3], sizes = [16, 1], strides = [1, 1]} : vector<16x10xf32> to vector<16x1xf32>
    %97 = vector.broadcast %96 : vector<16x1xf32> to vector<16x64xf32>
    %98 = arith.mulf %97, %63 : vector<16x64xf32>
    %99 = arith.addf %95, %98 : vector<16x64xf32>
    %100 = vector.extract_strided_slice %84 {offsets = [0, 4], sizes = [16, 1], strides = [1, 1]} : vector<16x10xf32> to vector<16x1xf32>
    %101 = vector.broadcast %100 : vector<16x1xf32> to vector<16x64xf32>
    %102 = arith.mulf %101, %64 : vector<16x64xf32>
    %103 = arith.addf %99, %102 : vector<16x64xf32>
    %104 = vector.broadcast %11 : vector<1x64xf32> to vector<16x64xf32>
    %105 = arith.mulf %103, %104 : vector<16x64xf32>
    %106 = vector.extract_strided_slice %57 {offsets = [32, 0], sizes = [16, 10], strides = [1, 1]} : vector<48x10xf32> to vector<16x10xf32>
    %107 = vector.extract_strided_slice %106 {offsets = [0, 0], sizes = [16, 1], strides = [1, 1]} : vector<16x10xf32> to vector<16x1xf32>
    %108 = vector.broadcast %107 : vector<16x1xf32> to vector<16x64xf32>
    %109 = arith.mulf %108, %60 : vector<16x64xf32>
    %110 = vector.extract_strided_slice %106 {offsets = [0, 1], sizes = [16, 1], strides = [1, 1]} : vector<16x10xf32> to vector<16x1xf32>
    %111 = vector.broadcast %110 : vector<16x1xf32> to vector<16x64xf32>
    %112 = arith.mulf %111, %61 : vector<16x64xf32>
    %113 = arith.addf %109, %112 : vector<16x64xf32>
    %114 = vector.extract_strided_slice %106 {offsets = [0, 2], sizes = [16, 1], strides = [1, 1]} : vector<16x10xf32> to vector<16x1xf32>
    %115 = vector.broadcast %114 : vector<16x1xf32> to vector<16x64xf32>
    %116 = arith.mulf %115, %62 : vector<16x64xf32>
    %117 = arith.addf %113, %116 : vector<16x64xf32>
    %118 = vector.extract_strided_slice %106 {offsets = [0, 3], sizes = [16, 1], strides = [1, 1]} : vector<16x10xf32> to vector<16x1xf32>
    %119 = vector.broadcast %118 : vector<16x1xf32> to vector<16x64xf32>
    %120 = arith.mulf %119, %63 : vector<16x64xf32>
    %121 = arith.addf %117, %120 : vector<16x64xf32>
    %122 = vector.extract_strided_slice %106 {offsets = [0, 4], sizes = [16, 1], strides = [1, 1]} : vector<16x10xf32> to vector<16x1xf32>
    %123 = vector.broadcast %122 : vector<16x1xf32> to vector<16x64xf32>
    %124 = arith.mulf %123, %64 : vector<16x64xf32>
    %125 = arith.addf %121, %124 : vector<16x64xf32>
    %126 = vector.extract_strided_slice %106 {offsets = [0, 5], sizes = [16, 1], strides = [1, 1]} : vector<16x10xf32> to vector<16x1xf32>
    %127 = vector.broadcast %126 : vector<16x1xf32> to vector<16x64xf32>
    %128 = arith.mulf %127, %65 : vector<16x64xf32>
    %129 = arith.addf %125, %128 : vector<16x64xf32>
    %130 = vector.extract_strided_slice %106 {offsets = [0, 6], sizes = [16, 1], strides = [1, 1]} : vector<16x10xf32> to vector<16x1xf32>
    %131 = vector.broadcast %130 : vector<16x1xf32> to vector<16x64xf32>
    %132 = arith.mulf %131, %66 : vector<16x64xf32>
    %133 = arith.addf %129, %132 : vector<16x64xf32>
    %134 = vector.extract_strided_slice %106 {offsets = [0, 7], sizes = [16, 1], strides = [1, 1]} : vector<16x10xf32> to vector<16x1xf32>
    %135 = vector.broadcast %134 : vector<16x1xf32> to vector<16x64xf32>
    %136 = arith.mulf %135, %67 : vector<16x64xf32>
    %137 = arith.addf %133, %136 : vector<16x64xf32>
    %138 = vector.extract_strided_slice %106 {offsets = [0, 8], sizes = [16, 1], strides = [1, 1]} : vector<16x10xf32> to vector<16x1xf32>
    %139 = vector.broadcast %138 : vector<16x1xf32> to vector<16x64xf32>
    %140 = arith.mulf %139, %68 : vector<16x64xf32>
    %141 = arith.addf %137, %140 : vector<16x64xf32>
    %142 = vector.extract_strided_slice %106 {offsets = [0, 9], sizes = [16, 1], strides = [1, 1]} : vector<16x10xf32> to vector<16x1xf32>
    %143 = vector.broadcast %142 : vector<16x1xf32> to vector<16x64xf32>
    %144 = arith.mulf %143, %69 : vector<16x64xf32>
    %145 = arith.addf %141, %144 : vector<16x64xf32>
    %146 = vector.broadcast %15 : vector<1x64xf32> to vector<16x64xf32>
    %147 = arith.mulf %145, %146 : vector<16x64xf32>
    %148 = tpu.concatenate %83, %105, %147, %17 in 0 : vector<16x64xf32>, vector<16x64xf32>, vector<16x64xf32>, vector<8x64xf32> -> vector<56x64xf32>
    %c0_12 = arith.constant 0 : index
    %c0_13 = arith.constant 0 : index
    %149 = vector.load %arg1[%c0_12, %c0_13] : memref<144x56xbf16, #tpu.memory_space<vmem>>, vector<144x56xbf16>
    %150 = arith.truncf %148 : vector<56x64xf32> to vector<56x64xbf16>
    %cst_14 = arith.constant dense<0.000000e+00> : vector<144x64xf32>
    %151 = tpu.matmul %149, %150, %cst_14 {dimension_numbers = #tpu.dot_dimension_numbers<[1], [0], [0], [1], [0, 0, 1, 1], [], []>} : vector<144x56xbf16>, vector<56x64xbf16>, vector<144x64xf32> -> vector<144x64xf32>
    %152 = arith.truncf %151 : vector<144x64xf32> to vector<144x64xbf16>
    %153 = vector.extract_strided_slice %152 {offsets = [0, 0], sizes = [16, 64], strides = [1, 1]} : vector<144x64xbf16> to vector<16x64xbf16>
    %154 = vector.extract_strided_slice %152 {offsets = [16, 0], sizes = [16, 64], strides = [1, 1]} : vector<144x64xbf16> to vector<16x64xbf16>
    %155 = vector.extract_strided_slice %152 {offsets = [32, 0], sizes = [16, 64], strides = [1, 1]} : vector<144x64xbf16> to vector<16x64xbf16>
    %cst_15 = arith.constant dense<0.000000e+00> : vector<64x64xf32>
    %156 = tpu.matmul %154, %153, %cst_15 {dimension_numbers = #tpu.dot_dimension_numbers<[0], [0], [1], [1], [0, 1, 1, 1], [], []>} : vector<16x64xbf16>, vector<16x64xbf16>, vector<64x64xf32> -> vector<64x64xf32>
    %cst_16 = arith.constant 2.500000e-01 : f32
    %157 = vector.broadcast %cst_16 : f32 to vector<64x64xf32>
    %158 = arith.mulf %156, %157 : vector<64x64xf32>
    %159 = arith.negf %158 : vector<64x64xf32>
    %160 = math.exp %159 : vector<64x64xf32>
    %cst_17 = arith.constant 1.000000e+00 : f32
    %161 = vector.broadcast %cst_17 : f32 to vector<64x64xf32>
    %162 = arith.addf %161, %160 : vector<64x64xf32>
    %163 = arith.divf %161, %162 : vector<64x64xf32>
    %164 = arith.mulf %163, %42 : vector<64x64xf32>
    %165 = arith.truncf %164 : vector<64x64xf32> to vector<64x64xbf16>
    %cst_18 = arith.constant dense<0.000000e+00> : vector<16x64xf32>
    %166 = tpu.matmul %155, %165, %cst_18 {dimension_numbers = #tpu.dot_dimension_numbers<[1], [0], [0], [1], [0, 0, 1, 1], [], []>} : vector<16x64xbf16>, vector<64x64xbf16>, vector<16x64xf32> -> vector<16x64xf32>
    %167 = vector.extract_strided_slice %152 {offsets = [48, 0], sizes = [16, 64], strides = [1, 1]} : vector<144x64xbf16> to vector<16x64xbf16>
    %168 = vector.extract_strided_slice %152 {offsets = [64, 0], sizes = [16, 64], strides = [1, 1]} : vector<144x64xbf16> to vector<16x64xbf16>
    %169 = vector.extract_strided_slice %152 {offsets = [80, 0], sizes = [16, 64], strides = [1, 1]} : vector<144x64xbf16> to vector<16x64xbf16>
    %cst_19 = arith.constant dense<0.000000e+00> : vector<64x64xf32>
    %170 = tpu.matmul %168, %167, %cst_19 {dimension_numbers = #tpu.dot_dimension_numbers<[0], [0], [1], [1], [0, 1, 1, 1], [], []>} : vector<16x64xbf16>, vector<16x64xbf16>, vector<64x64xf32> -> vector<64x64xf32>
    %cst_20 = arith.constant 2.500000e-01 : f32
    %171 = vector.broadcast %cst_20 : f32 to vector<64x64xf32>
    %172 = arith.mulf %170, %171 : vector<64x64xf32>
    %173 = arith.negf %172 : vector<64x64xf32>
    %174 = math.exp %173 : vector<64x64xf32>
    %cst_21 = arith.constant 1.000000e+00 : f32
    %175 = vector.broadcast %cst_21 : f32 to vector<64x64xf32>
    %176 = arith.addf %175, %174 : vector<64x64xf32>
    %177 = arith.divf %175, %176 : vector<64x64xf32>
    %178 = arith.mulf %177, %42 : vector<64x64xf32>
    %179 = arith.truncf %178 : vector<64x64xf32> to vector<64x64xbf16>
    %cst_22 = arith.constant dense<0.000000e+00> : vector<16x64xf32>
    %180 = tpu.matmul %169, %179, %cst_22 {dimension_numbers = #tpu.dot_dimension_numbers<[1], [0], [0], [1], [0, 0, 1, 1], [], []>} : vector<16x64xbf16>, vector<64x64xbf16>, vector<16x64xf32> -> vector<16x64xf32>
    %181 = vector.extract_strided_slice %152 {offsets = [96, 0], sizes = [16, 64], strides = [1, 1]} : vector<144x64xbf16> to vector<16x64xbf16>
    %182 = vector.extract_strided_slice %152 {offsets = [112, 0], sizes = [16, 64], strides = [1, 1]} : vector<144x64xbf16> to vector<16x64xbf16>
    %183 = vector.extract_strided_slice %152 {offsets = [128, 0], sizes = [16, 64], strides = [1, 1]} : vector<144x64xbf16> to vector<16x64xbf16>
    %cst_23 = arith.constant dense<0.000000e+00> : vector<64x64xf32>
    %184 = tpu.matmul %182, %181, %cst_23 {dimension_numbers = #tpu.dot_dimension_numbers<[0], [0], [1], [1], [0, 1, 1, 1], [], []>} : vector<16x64xbf16>, vector<16x64xbf16>, vector<64x64xf32> -> vector<64x64xf32>
    %cst_24 = arith.constant 2.500000e-01 : f32
    %185 = vector.broadcast %cst_24 : f32 to vector<64x64xf32>
    %186 = arith.mulf %184, %185 : vector<64x64xf32>
    %187 = arith.negf %186 : vector<64x64xf32>
    %188 = math.exp %187 : vector<64x64xf32>
    %cst_25 = arith.constant 1.000000e+00 : f32
    %189 = vector.broadcast %cst_25 : f32 to vector<64x64xf32>
    %190 = arith.addf %189, %188 : vector<64x64xf32>
    %191 = arith.divf %189, %190 : vector<64x64xf32>
    %192 = arith.mulf %191, %42 : vector<64x64xf32>
    %193 = arith.truncf %192 : vector<64x64xf32> to vector<64x64xbf16>
    %cst_26 = arith.constant dense<0.000000e+00> : vector<16x64xf32>
    %194 = tpu.matmul %183, %193, %cst_26 {dimension_numbers = #tpu.dot_dimension_numbers<[1], [0], [0], [1], [0, 0, 1, 1], [], []>} : vector<16x64xbf16>, vector<64x64xbf16>, vector<16x64xf32> -> vector<16x64xf32>
    %195 = tpu.concatenate %166, %180, %194, %20 in 0 : vector<16x64xf32>, vector<16x64xf32>, vector<16x64xf32>, vector<8x64xf32> -> vector<56x64xf32>
    %c0_27 = arith.constant 0 : index
    %c0_28 = arith.constant 0 : index
    %196 = vector.load %arg2[%c0_27, %c0_28] : memref<48x56xbf16, #tpu.memory_space<vmem>>, vector<48x56xbf16>
    %197 = arith.truncf %195 : vector<56x64xf32> to vector<56x64xbf16>
    %cst_29 = arith.constant dense<0.000000e+00> : vector<48x64xf32>
    %198 = tpu.matmul %196, %197, %cst_29 {dimension_numbers = #tpu.dot_dimension_numbers<[1], [0], [0], [1], [0, 0, 1, 1], [], []>} : vector<48x56xbf16>, vector<56x64xbf16>, vector<48x64xf32> -> vector<48x64xf32>
    %199 = arith.mulf %198, %33 : vector<48x64xf32>
    %cst_30 = arith.constant dense<0.000000e+00> : vector<48x2xf32>
    %200 = tpu.matmul %199, %49, %cst_30 {dimension_numbers = #tpu.dot_dimension_numbers<[1], [0], [0], [1], [0, 0, 1, 1], [], []>} : vector<48x64xf32>, vector<64x2xf32>, vector<48x2xf32> -> vector<48x2xf32>
    %cst_31 = arith.constant 0.000000e+00 : f32
    %201 = vector.broadcast %cst_31 : f32 to vector<48x2xf32>
    %202 = arith.maximumf %200, %201 : vector<48x2xf32>
    %c0_32 = arith.constant 0 : index
    %c0_33 = arith.constant 0 : index
    %203 = vector.load %arg4[%c0_32, %c0_33] : memref<16x58xf32, #tpu.memory_space<vmem>>, vector<16x58xf32>
    %204 = vector.extract_strided_slice %203 {offsets = [0, 0], sizes = [8, 48], strides = [1, 1]} : vector<16x58xf32> to vector<8x48xf32>
    %205 = vector.extract_strided_slice %203 {offsets = [0, 48], sizes = [8, 1], strides = [1, 1]} : vector<16x58xf32> to vector<8x1xf32>
    %206 = vector.extract_strided_slice %203 {offsets = [0, 49], sizes = [16, 8], strides = [1, 1]} : vector<16x58xf32> to vector<16x8xf32>
    %207 = vector.extract_strided_slice %203 {offsets = [0, 57], sizes = [16, 1], strides = [1, 1]} : vector<16x58xf32> to vector<16x1xf32>
    %cst_34 = arith.constant dense<0.000000e+00> : vector<8x2xf32>
    %208 = tpu.matmul %204, %202, %cst_34 {dimension_numbers = #tpu.dot_dimension_numbers<[1], [0], [0], [1], [0, 0, 1, 1], [], []>} : vector<8x48xf32>, vector<48x2xf32>, vector<8x2xf32> -> vector<8x2xf32>
    %209 = vector.broadcast %205 : vector<8x1xf32> to vector<8x2xf32>
    %210 = arith.addf %208, %209 : vector<8x2xf32>
    %cst_35 = arith.constant 0.000000e+00 : f32
    %211 = vector.broadcast %cst_35 : f32 to vector<8x2xf32>
    %212 = arith.maximumf %210, %211 : vector<8x2xf32>
    %cst_36 = arith.constant dense<0.000000e+00> : vector<16x2xf32>
    %213 = tpu.matmul %206, %212, %cst_36 {dimension_numbers = #tpu.dot_dimension_numbers<[1], [0], [0], [1], [0, 0, 1, 1], [], []>} : vector<16x8xf32>, vector<8x2xf32>, vector<16x2xf32> -> vector<16x2xf32>
    %214 = vector.broadcast %207 : vector<16x1xf32> to vector<16x2xf32>
    %215 = arith.addf %213, %214 : vector<16x2xf32>
    %216 = arith.negf %215 : vector<16x2xf32>
    %217 = math.exp %216 : vector<16x2xf32>
    %cst_37 = arith.constant 1.000000e+00 : f32
    %218 = vector.broadcast %cst_37 : f32 to vector<16x2xf32>
    %219 = arith.addf %218, %217 : vector<16x2xf32>
    %220 = arith.divf %218, %219 : vector<16x2xf32>
    %cst_38 = arith.constant dense<0.000000e+00> : vector<16x64xf32>
    %221 = tpu.matmul %220, %56, %cst_38 {dimension_numbers = #tpu.dot_dimension_numbers<[1], [0], [0], [1], [0, 0, 1, 1], [], []>} : vector<16x2xf32>, vector<2x64xf32>, vector<16x64xf32> -> vector<16x64xf32>
    %222 = arith.mulf %0, %221 : vector<16x64xf32>
    %c0_39 = arith.constant 0 : index
    %c0_40 = arith.constant 0 : index
    %223 = vector.load %arg5[%c0_39, %c0_40] : memref<16x64xf32, #tpu.memory_space<vmem>>, vector<16x64xf32>
    tpu.vector_store %arg5[%c0_39, %c0_40], %222 {strides = array<i32>} : memref<16x64xf32, #tpu.memory_space<vmem>>, vector<16x64xf32>,
    return
  }
}

</mosaic_0001>

<llo_original>
// kernel: tpu_custom_call.1
$region0: #{tpu_custom_call.1}
  #allocation0 [shape = 'u32[]', space=smem, size = 0x4, offset = 0x4, fixed_abs, tag = 'smem constant byte address 0x4 - core index']
  #allocation1 [shape = 'u32[144,128]{1,0:T(1,128)}', space=vmem, size = 0x12000, scoped, tag = 'internal scratch']
  %s0 = inlined_call_operand.hbm [shape: f32[16,64], index: 0, kind: input, shape index: {}, may-alias: {0,5}]
  %s1 = inlined_call_operand.vmem [shape: bf16[144,56], index: 1, kind: input, shape index: {}]
  %s2 = inlined_call_operand.vmem [shape: bf16[48,56], index: 2, kind: input, shape index: {}]
  %s3 = inlined_call_operand.vmem [shape: f32[48,10], index: 3, kind: input, shape index: {}]
  %s4 = inlined_call_operand.vmem [shape: f32[16,58], index: 4, kind: input, shape index: {}]
  %s5 = inlined_call_operand.hbm [shape: f32[16,64], index: 5, kind: output, shape index: {}, may-alias: {0,5}]
  %s6 = sld [smem:[#allocation0]]
  $region34: #{tpu_custom_call.1} parent=0
    _
  %s8 = ssub.s32 1, %s6
  %s9 = scalar_select 0, %s8, %s6
  $region1: #{tpu_custom_call.1} parent=0
    #allocation2 [shape = 'u8[8192]{0}', space=vmem, size = 0x2000, scoped, tag = 'input window, operand 0, single buffered']
    #allocation3 [shape = 's32[1]{0}', space=sflag, size = 0x4, scoped, tag = 'scoped memory for tpu_custom_call.1']
    #allocation4 [shape = 's32[1]{0}', space=sflag, size = 0x4, scoped, tag = 'scoped memory for tpu_custom_call.1']
    #allocation5 [shape = 'u8[8192]{0}', space=vmem, size = 0x2000, scoped, tag = 'output window, operand 0, single buffered']
    %10 = vsyncpa [#allocation3], 0
    %11 = vsyncpa [#allocation4], 0
    // Predicated region
    $region2: #{tpu_custom_call.1} parent=1 // pred_check
      _
    $region3: #{tpu_custom_call.1} parent=1 // pred_check_branch
      %13 = sbr.rel (0) target = $region5
    $region4: #{tpu_custom_call.1} parent=1 // pred_region
      %s15 = ssub.s32 256, 256
      %16 = vsyncadd [#allocation3], %s15
      %s17 = sshll.u32 [#allocation2], 4
      %s18 = int_to_ptr.vmem [resolvable:$true] %s17
      %23 = dma.hbm_to_vmem [thread:$0]  %s0, 256, %s18, [#allocation3], 128, 128, 8
    $region5: #{tpu_custom_call.1} parent=1 // pred_fallthru
      _
    // Predicated region
    $region6: #{tpu_custom_call.1} parent=1 // pred_check
      _
    $region7: #{tpu_custom_call.1} parent=1 // pred_check_branch
      %25 = sbr.rel (0) target = $region9
    $region8: #{tpu_custom_call.1} parent=1 // pred_region
      _
    $region9: #{tpu_custom_call.1} parent=1 // pred_fallthru
      _
    // Predicated region
    $region10: #{tpu_custom_call.1} parent=1 // pred_check
      _
    $region11: #{tpu_custom_call.1} parent=1 // pred_check_branch
      %27 = sbr.rel (0) target = $region13
    $region12: #{tpu_custom_call.1} parent=1 // pred_region
      _
    $region13: #{tpu_custom_call.1} parent=1 // pred_fallthru
      _
    // Predicated region
    $region14: #{tpu_custom_call.1} parent=1 // pred_check
      _
    $region15: #{tpu_custom_call.1} parent=1 // pred_check_branch
      %29 = sbr.rel (0) target = $region17
    $region16: #{tpu_custom_call.1} parent=1 // pred_region
      _
    $region17: #{tpu_custom_call.1} parent=1 // pred_fallthru
      _
    // Predicated region
    $region18: #{tpu_custom_call.1} parent=1 // pred_check
      _
    $region19: #{tpu_custom_call.1} parent=1 // pred_check_branch
      %31 = sbr.rel (0) target = $region21
    $region20: #{tpu_custom_call.1} parent=1 // pred_region
      _
    $region21: #{tpu_custom_call.1} parent=1 // pred_fallthru
      _
    // Predicated region
    $region22: #{tpu_custom_call.1} parent=1 // pred_check
      _
    $region23: #{tpu_custom_call.1} parent=1 // pred_check_branch
      %33 = sbr.rel (0) target = $region25
    $region24: #{tpu_custom_call.1} parent=1 // pred_region
      %34 = dma.done [#allocation3], 256
    $region25: #{tpu_custom_call.1} parent=1 // pred_fallthru
      _
    %v36 = vld [vmem:[#allocation2] sm:$0xff]
    %v37 = vld [vmem:[#allocation2 + $0x8] sm:$0xff]
    %v38 = vlaneseq
    %v39 = vand.u32 %v38, 127
    %v40 = vand.u32 %v39, 31
    %vm41 = vcmp.lt.s32.totalorder %v40, 30
    %v42 = vsel %vm41, 1, 0
    %v43 = vcvt.s32.f32 %v42
    %vm44 = vcmp.lt.s32.totalorder %v40, 28
    %v45 = vsel %vm44, 1, 0
    %v46 = vcvt.s32.f32 %v45
    %vm47 = vcmp.lt.s32.totalorder %v40, 23
    %v48 = vsel %vm47, 1, 0
    %v49 = vcvt.s32.f32 %v48
    %vm50 = vcmask 1040384
    %v51 = vsel %vm50, %v43, %v46
    %vm52 = vcmask 1041408
    %v53 = vsel %vm52, %v51, %v49
    %vm54 = vcmask 1042432
    %v55 = vsel %vm54, %v53, 0.0
    %v56 = vsel %vm50, 1.0, 0.0
    %v57 = vmul.f32 %v43, 0.033333335
    %v58 = vmul.f32 %v46, 0.035714287
    %v59 = vmul.f32 %v49, 0.04347826
    %v60 = vlaneseq
    %v61 = vshrl.u32 %v60, 7
    %v62 = vadd.s32 %v61, 8
    %v63 = vadd.s32 %v61, 16
    %v64 = vadd.s32 %v61, 24
    %v65 = vadd.s32 %v61, 32
    %v66 = vadd.s32 %v61, 40
    %v67 = vadd.s32 %v61, 48
    %v68 = vadd.s32 %v61, 56
    %v69 = vshra.s32 %v61, 5
    %v70 = vshra.s32 %v62, 5
    %v71 = vshra.s32 %v63, 5
    %v72 = vshra.s32 %v64, 5
    %v73 = vshra.s32 %v65, 5
    %v74 = vshra.s32 %v66, 5
    %v75 = vshra.s32 %v67, 5
    %v76 = vshra.s32 %v68, 5
    %v77 = vshra.s32 %v39, 5
    %vm78 = vcmp.eq.s32.totalorder %v69, %v77
    %vm79 = vcmp.eq.s32.totalorder %v70, %v77
    %vm80 = vcmp.eq.s32.totalorder %v71, %v77
    %vm81 = vcmp.eq.s32.totalorder %v72, %v77
    %vm82 = vcmp.eq.s32.totalorder %v73, %v77
    %vm83 = vcmp.eq.s32.totalorder %v74, %v77
    %vm84 = vcmp.eq.s32.totalorder %v75, %v77
    %vm85 = vcmp.eq.s32.totalorder %v76, %v77
    %v86 = vsel %vm78, 1, 0
    %v87 = vsel %vm79, 1, 0
    %v88 = vsel %vm80, 1, 0
    %v89 = vsel %vm81, 1, 0
    %v90 = vsel %vm82, 1, 0
    %v91 = vsel %vm83, 1, 0
    %v92 = vsel %vm84, 1, 0
    %v93 = vsel %vm85, 1, 0
    %v94 = vcvt.s32.f32 %v86
    %v95 = vcvt.s32.f32 %v87
    %v96 = vcvt.s32.f32 %v88
    %v97 = vcvt.s32.f32 %v89
    %v98 = vcvt.s32.f32 %v90
    %v99 = vcvt.s32.f32 %v91
    %v100 = vcvt.s32.f32 %v92
    %v101 = vcvt.s32.f32 %v93
    %vm102 = vcmp.eq.s32.totalorder %v69, %v39
    %vm103 = vcmp.eq.s32.totalorder %v70, %v39
    %vm104 = vcmp.eq.s32.totalorder %v71, %v39
    %vm105 = vcmp.eq.s32.totalorder %v72, %v39
    %vm106 = vcmp.eq.s32.totalorder %v73, %v39
    %vm107 = vcmp.eq.s32.totalorder %v74, %v39
    %vm108 = vcmp.eq.s32.totalorder %v75, %v39
    %vm109 = vcmp.eq.s32.totalorder %v76, %v39
    %v110 = vsel %vm102, 1, 0
    %v111 = vsel %vm103, 1, 0
    %v112 = vsel %vm104, 1, 0
    %v113 = vsel %vm105, 1, 0
    %v114 = vsel %vm106, 1, 0
    %v115 = vsel %vm107, 1, 0
    %v116 = vsel %vm108, 1, 0
    %v117 = vsel %vm109, 1, 0
    %v118 = vcvt.s32.f32 %v110
    %v119 = vcvt.s32.f32 %v111
    %v120 = vcvt.s32.f32 %v112
    %v121 = vcvt.s32.f32 %v113
    %v122 = vcvt.s32.f32 %v114
    %v123 = vcvt.s32.f32 %v115
    %v124 = vcvt.s32.f32 %v116
    %v125 = vcvt.s32.f32 %v117
    %vm126 = vcmp.eq.s32.totalorder %v61, %v77
    %v127 = vsel %vm126, 1, 0
    %v128 = vcvt.s32.f32 %v127
    %v129 = vld [vmem:[%s3] sm:$0xff]
    %v130 = vld [vmem:[%s3 + $0x8] sm:$0xff]
    %v131 = vld [vmem:[%s3 + $0x10] sm:$0xff]
    %v132 = vld [vmem:[%s3 + $0x18] sm:$0xff]
    %v133 = vld [vmem:[%s3 + $0x20] sm:$0xff]
    %v134 = vld [vmem:[%s3 + $0x28] sm:$0xff]
    %vm135 = vcmask 523264
    %v136 = vsel %vm135, %v36, 0.0
    %v137 = vsel %vm135, %v37, 0.0
    %139 = vset.pattern.permute.xlu0 0
    %140 = vperm.xlu0 %139, %v129
    %v141 = vpop.permute.xlu0 %140
    %144 = vset.pattern.permute.xlu0 0
    %145 = vperm.xlu0 %144, %v130
    %v146 = vpop.permute.xlu0 %145
    %v148 = vmul.f32 %v141, %v136
    %v149 = vmul.f32 %v146, %v137
    %150 = vset.pattern.permute.xlu0 1
    %151 = vperm.xlu0 %150, %v129
    %v152 = vpop.permute.xlu0 %151
    %154 = vset.pattern.permute.xlu0 1
    %155 = vperm.xlu0 %154, %v130
    %v156 = vpop.permute.xlu0 %155
    %v158 = vmul.f32 %v152, %v136
    %v159 = vmul.f32 %v156, %v137
    %162 = vrot.lane.b32.xlu0 %v158, 127
    %v163 = vpop.permute.xlu0 %162
    %164 = vrot.lane.b32.xlu0 %v159, 127
    %v165 = vpop.permute.xlu0 %164
    %v168 = vadd.f32 %v148, %v163
    %v169 = vadd.f32 %v149, %v165
    %170 = vset.pattern.permute.xlu0 2
    %171 = vperm.xlu0 %170, %v129
    %v172 = vpop.permute.xlu0 %171
    %174 = vset.pattern.permute.xlu0 2
    %175 = vperm.xlu0 %174, %v130
    %v176 = vpop.permute.xlu0 %175
    %v178 = vmul.f32 %v172, %v136
    %v179 = vmul.f32 %v176, %v137
    %182 = vrot.lane.b32.xlu0 %v178, 126
    %v183 = vpop.permute.xlu0 %182
    %184 = vrot.lane.b32.xlu0 %v179, 126
    %v185 = vpop.permute.xlu0 %184
    %v188 = vadd.f32 %v168, %v183
    %v189 = vadd.f32 %v169, %v185
    %v190 = vmul.f32 %v188, %v43
    %v191 = vmul.f32 %v189, %v43
    %193 = vset.pattern.permute.xlu0 0
    %194 = vperm.xlu0 %193, %v131
    %v195 = vpop.permute.xlu0 %194
    %198 = vset.pattern.permute.xlu0 0
    %199 = vperm.xlu0 %198, %v132
    %v200 = vpop.permute.xlu0 %199
    %v202 = vmul.f32 %v195, %v136
    %v203 = vmul.f32 %v200, %v137
    %204 = vset.pattern.permute.xlu0 1
    %205 = vperm.xlu0 %204, %v131
    %v206 = vpop.permute.xlu0 %205
    %208 = vset.pattern.permute.xlu0 1
    %209 = vperm.xlu0 %208, %v132
    %v210 = vpop.permute.xlu0 %209
    %v212 = vmul.f32 %v206, %v136
    %v213 = vmul.f32 %v210, %v137
    %216 = vrot.lane.b32.xlu0 %v212, 127
    %v217 = vpop.permute.xlu0 %216
    %218 = vrot.lane.b32.xlu0 %v213, 127
    %v219 = vpop.permute.xlu0 %218
    %v222 = vadd.f32 %v202, %v217
    %v223 = vadd.f32 %v203, %v219
    %224 = vset.pattern.permute.xlu0 2
    %225 = vperm.xlu0 %224, %v131
    %v226 = vpop.permute.xlu0 %225
    %228 = vset.pattern.permute.xlu0 2
    %229 = vperm.xlu0 %228, %v132
    %v230 = vpop.permute.xlu0 %229
    %v232 = vmul.f32 %v226, %v136
    %v233 = vmul.f32 %v230, %v137
    %236 = vrot.lane.b32.xlu0 %v232, 126
    %v237 = vpop.permute.xlu0 %236
    %238 = vrot.lane.b32.xlu0 %v233, 126
    %v239 = vpop.permute.xlu0 %238
    %v242 = vadd.f32 %v222, %v237
    %v243 = vadd.f32 %v223, %v239
    %244 = vset.pattern.permute.xlu0 3
    %245 = vperm.xlu0 %244, %v131
    %v246 = vpop.permute.xlu0 %245
    %248 = vset.pattern.permute.xlu0 3
    %249 = vperm.xlu0 %248, %v132
    %v250 = vpop.permute.xlu0 %249
    %v252 = vmul.f32 %v246, %v136
    %v253 = vmul.f32 %v250, %v137
    %256 = vrot.lane.b32.xlu0 %v252, 125
    %v257 = vpop.permute.xlu0 %256
    %258 = vrot.lane.b32.xlu0 %v253, 125
    %v259 = vpop.permute.xlu0 %258
    %v262 = vadd.f32 %v242, %v257
    %v263 = vadd.f32 %v243, %v259
    %264 = vset.pattern.permute.xlu0 4
    %265 = vperm.xlu0 %264, %v131
    %v266 = vpop.permute.xlu0 %265
    %268 = vset.pattern.permute.xlu0 4
    %269 = vperm.xlu0 %268, %v132
    %v270 = vpop.permute.xlu0 %269
    %v272 = vmul.f32 %v266, %v136
    %v273 = vmul.f32 %v270, %v137
    %276 = vrot.lane.b32.xlu0 %v272, 124
    %v277 = vpop.permute.xlu0 %276
    %278 = vrot.lane.b32.xlu0 %v273, 124
    %v279 = vpop.permute.xlu0 %278
    %v282 = vadd.f32 %v262, %v277
    %v283 = vadd.f32 %v263, %v279
    %v284 = vmul.f32 %v282, %v46
    %v285 = vmul.f32 %v283, %v46
    %287 = vset.pattern.permute.xlu0 0
    %288 = vperm.xlu0 %287, %v133
    %v289 = vpop.permute.xlu0 %288
    %292 = vset.pattern.permute.xlu0 0
    %293 = vperm.xlu0 %292, %v134
    %v294 = vpop.permute.xlu0 %293
    %v296 = vmul.f32 %v289, %v136
    %v297 = vmul.f32 %v294, %v137
    %298 = vset.pattern.permute.xlu0 1
    %299 = vperm.xlu0 %298, %v133
    %v300 = vpop.permute.xlu0 %299
    %302 = vset.pattern.permute.xlu0 1
    %303 = vperm.xlu0 %302, %v134
    %v304 = vpop.permute.xlu0 %303
    %v306 = vmul.f32 %v300, %v136
    %v307 = vmul.f32 %v304, %v137
    %310 = vrot.lane.b32.xlu0 %v306, 127
    %v311 = vpop.permute.xlu0 %310
    %312 = vrot.lane.b32.xlu0 %v307, 127
    %v313 = vpop.permute.xlu0 %312
    %v316 = vadd.f32 %v296, %v311
    %v317 = vadd.f32 %v297, %v313
    %318 = vset.pattern.permute.xlu0 2
    %319 = vperm.xlu0 %318, %v133
    %v320 = vpop.permute.xlu0 %319
    %322 = vset.pattern.permute.xlu0 2
    %323 = vperm.xlu0 %322, %v134
    %v324 = vpop.permute.xlu0 %323
    %v326 = vmul.f32 %v320, %v136
    %v327 = vmul.f32 %v324, %v137
    %330 = vrot.lane.b32.xlu0 %v326, 126
    %v331 = vpop.permute.xlu0 %330
    %332 = vrot.lane.b32.xlu0 %v327, 126
    %v333 = vpop.permute.xlu0 %332
    %v336 = vadd.f32 %v316, %v331
    %v337 = vadd.f32 %v317, %v333
    %338 = vset.pattern.permute.xlu0 3
    %339 = vperm.xlu0 %338, %v133
    %v340 = vpop.permute.xlu0 %339
    %342 = vset.pattern.permute.xlu0 3
    %343 = vperm.xlu0 %342, %v134
    %v344 = vpop.permute.xlu0 %343
    %v346 = vmul.f32 %v340, %v136
    %v347 = vmul.f32 %v344, %v137
    %350 = vrot.lane.b32.xlu0 %v346, 125
    %v351 = vpop.permute.xlu0 %350
    %352 = vrot.lane.b32.xlu0 %v347, 125
    %v353 = vpop.permute.xlu0 %352
    %v356 = vadd.f32 %v336, %v351
    %v357 = vadd.f32 %v337, %v353
    %358 = vset.pattern.permute.xlu0 4
    %359 = vperm.xlu0 %358, %v133
    %v360 = vpop.permute.xlu0 %359
    %362 = vset.pattern.permute.xlu0 4
    %363 = vperm.xlu0 %362, %v134
    %v364 = vpop.permute.xlu0 %363
    %v366 = vmul.f32 %v360, %v136
    %v367 = vmul.f32 %v364, %v137
    %370 = vrot.lane.b32.xlu0 %v366, 124
    %v371 = vpop.permute.xlu0 %370
    %372 = vrot.lane.b32.xlu0 %v367, 124
    %v373 = vpop.permute.xlu0 %372
    %v376 = vadd.f32 %v356, %v371
    %v377 = vadd.f32 %v357, %v373
    %378 = vset.pattern.permute.xlu0 5
    %379 = vperm.xlu0 %378, %v133
    %v380 = vpop.permute.xlu0 %379
    %382 = vset.pattern.permute.xlu0 5
    %383 = vperm.xlu0 %382, %v134
    %v384 = vpop.permute.xlu0 %383
    %v386 = vmul.f32 %v380, %v136
    %v387 = vmul.f32 %v384, %v137
    %390 = vrot.lane.b32.xlu0 %v386, 123
    %v391 = vpop.permute.xlu0 %390
    %392 = vrot.lane.b32.xlu0 %v387, 123
    %v393 = vpop.permute.xlu0 %392
    %v396 = vadd.f32 %v376, %v391
    %v397 = vadd.f32 %v377, %v393
    %398 = vset.pattern.permute.xlu0 6
    %399 = vperm.xlu0 %398, %v133
    %v400 = vpop.permute.xlu0 %399
    %402 = vset.pattern.permute.xlu0 6
    %403 = vperm.xlu0 %402, %v134
    %v404 = vpop.permute.xlu0 %403
    %v406 = vmul.f32 %v400, %v136
    %v407 = vmul.f32 %v404, %v137
    %410 = vrot.lane.b32.xlu0 %v406, 122
    %v411 = vpop.permute.xlu0 %410
    %412 = vrot.lane.b32.xlu0 %v407, 122
    %v413 = vpop.permute.xlu0 %412
    %v416 = vadd.f32 %v396, %v411
    %v417 = vadd.f32 %v397, %v413
    %418 = vset.pattern.permute.xlu0 7
    %419 = vperm.xlu0 %418, %v133
    %v420 = vpop.permute.xlu0 %419
    %422 = vset.pattern.permute.xlu0 7
    %423 = vperm.xlu0 %422, %v134
    %v424 = vpop.permute.xlu0 %423
    %v426 = vmul.f32 %v420, %v136
    %v427 = vmul.f32 %v424, %v137
    %430 = vrot.lane.b32.xlu0 %v426, 121
    %v431 = vpop.permute.xlu0 %430
    %432 = vrot.lane.b32.xlu0 %v427, 121
    %v433 = vpop.permute.xlu0 %432
    %v436 = vadd.f32 %v416, %v431
    %v437 = vadd.f32 %v417, %v433
    %438 = vset.pattern.permute.xlu0 8
    %439 = vperm.xlu0 %438, %v133
    %v440 = vpop.permute.xlu0 %439
    %442 = vset.pattern.permute.xlu0 8
    %443 = vperm.xlu0 %442, %v134
    %v444 = vpop.permute.xlu0 %443
    %v446 = vmul.f32 %v440, %v136
    %v447 = vmul.f32 %v444, %v137
    %450 = vrot.lane.b32.xlu0 %v446, 120
    %v451 = vpop.permute.xlu0 %450
    %452 = vrot.lane.b32.xlu0 %v447, 120
    %v453 = vpop.permute.xlu0 %452
    %v456 = vadd.f32 %v436, %v451
    %v457 = vadd.f32 %v437, %v453
    %458 = vset.pattern.permute.xlu0 9
    %459 = vperm.xlu0 %458, %v133
    %v460 = vpop.permute.xlu0 %459
    %462 = vset.pattern.permute.xlu0 9
    %463 = vperm.xlu0 %462, %v134
    %v464 = vpop.permute.xlu0 %463
    %v466 = vmul.f32 %v460, %v136
    %v467 = vmul.f32 %v464, %v137
    %470 = vrot.lane.b32.xlu0 %v466, 119
    %v471 = vpop.permute.xlu0 %470
    %472 = vrot.lane.b32.xlu0 %v467, 119
    %v473 = vpop.permute.xlu0 %472
    %v476 = vadd.f32 %v456, %v471
    %v477 = vadd.f32 %v457, %v473
    %v478 = vmul.f32 %v476, %v49
    %v479 = vmul.f32 %v477, %v49
    %v480 = vld [vmem:[%s1] sm:$0xf]
    %v481 = vld [vmem:[%s1 + $0x4] sm:$0xf]
    %v482 = vld [vmem:[%s1 + $0x8] sm:$0xf]
    %v483 = vld [vmem:[%s1 + $0xc] sm:$0xf]
    %v484 = vld [vmem:[%s1 + $0x10] sm:$0xf]
    %v485 = vld [vmem:[%s1 + $0x14] sm:$0xf]
    %v486 = vld [vmem:[%s1 + $0x18] sm:$0xf]
    %v487 = vld [vmem:[%s1 + $0x1c] sm:$0xf]
    %v488 = vld [vmem:[%s1 + $0x20] sm:$0xf]
    %v489 = vld [vmem:[%s1 + $0x24] sm:$0xf]
    %v490 = vld [vmem:[%s1 + $0x28] sm:$0xf]
    %v491 = vld [vmem:[%s1 + $0x2c] sm:$0xf]
    %v492 = vld [vmem:[%s1 + $0x30] sm:$0xf]
    %v493 = vld [vmem:[%s1 + $0x34] sm:$0xf]
    %v494 = vld [vmem:[%s1 + $0x38] sm:$0xf]
    %v495 = vld [vmem:[%s1 + $0x3c] sm:$0xf]
    %v496 = vld [vmem:[%s1 + $0x40] sm:$0xf]
    %v497 = vld [vmem:[%s1 + $0x44] sm:$0xf]
    %v498 = vpack.c.bf16 %v191, %v190
    %v499 = vpack.c.bf16 %v285, %v284
    %v500 = vpack.c.bf16 %v479, %v478
    %v501 = vpack.c.bf16 %v55, %v55
    %v520 = vunpack.c.l.b16 %v480
    %v521 = vunpack.c.l.b16 %v481
    %v522 = vunpack.c.l.b16 %v482
    %v523 = vunpack.c.l.b16 %v483
    %v524 = vunpack.c.l.b16 %v484
    %v525 = vunpack.c.l.b16 %v485
    %v526 = vunpack.c.l.b16 %v486
    %v527 = vunpack.c.l.b16 %v487
    %v528 = vunpack.c.l.b16 %v488
    %v529 = vunpack.c.l.b16 %v489
    %v530 = vunpack.c.l.b16 %v490
    %v531 = vunpack.c.l.b16 %v491
    %v532 = vunpack.c.l.b16 %v492
    %v533 = vunpack.c.l.b16 %v493
    %v534 = vunpack.c.l.b16 %v494
    %v535 = vunpack.c.l.b16 %v495
    %v536 = vunpack.c.l.b16 %v496
    %v537 = vunpack.c.l.b16 %v497
    %v538 = vpack.c.b16 %v521, %v520
    %v539 = vpack.c.b16 %v523, %v522
    %v540 = vpack.c.b16 %v525, %v524
    %v541 = vpack.c.b16 %v527, %v526
    %v542 = vpack.c.b16 %v529, %v528
    %v543 = vpack.c.b16 %v531, %v530
    %v544 = vpack.c.b16 %v533, %v532
    %v545 = vpack.c.b16 %v535, %v534
    %v546 = vpack.c.b16 %v537, %v536
    %vm547 = vcmask 457728
    %v549 = vsel %vm547, %v538, 0
    %v552 = vsel %vm547, %v539, 0
    %v555 = vsel %vm547, %v540, 0
    %v558 = vsel %vm547, %v541, 0
    %v561 = vsel %vm547, %v542, 0
    %v564 = vsel %vm547, %v543, 0
    %v567 = vsel %vm547, %v544, 0
    %v570 = vsel %vm547, %v545, 0
    %v573 = vsel %vm547, %v546, 0
    %vm575 = vcmask 1043456
    %v577 = vsel %vm575, %v501, 0
    %579 = vmatprep.subr.bf16.mxu0 0
    %580 = vmatpush1.bf16.msra.mxu0 %v498
    %581 = vmatprep.subr.bf16.mxu0 0
    %582 = vmatpush1.bf16.msra.mxu0 %v499
    %583 = vmatprep.subr.bf16.mxu0 0
    %584 = vmatpush1.bf16.msra.mxu0 %v500
    %585 = vmatprep.subr.bf16.mxu0 0
    %586 = vmatpush1.bf16.msra.mxu0 %v577
    %587 = vmatprep.subr.bf16.mxu0 0
    %588 = vmatpush1.bf16.msra.mxu0 0
    %589 = vmatprep.subr.bf16.mxu0 0
    %590 = vmatpush1.bf16.msra.mxu0 0
    %591 = vmatprep.subr.bf16.mxu0 0
    %592 = vmatpush1.bf16.msra.mxu0 0
    %593 = vmatprep.subr.bf16.mxu0 0
    %594 = vmatpush1.bf16.msra.mxu0 0
    %595 = vmatprep.subr.bf16.mxu0 0
    %596 = vmatpush1.bf16.msra.mxu0 0
    %597 = vmatprep.subr.bf16.mxu0 0
    %598 = vmatpush1.bf16.msra.mxu0 0
    %599 = vmatprep.subr.bf16.mxu0 0
    %600 = vmatpush1.bf16.msra.mxu0 0
    %601 = vmatprep.subr.bf16.mxu0 0
    %602 = vmatpush1.bf16.msra.mxu0 0
    %603 = vmatprep.subr.bf16.mxu0 0
    %604 = vmatpush1.bf16.msra.mxu0 0
    %605 = vmatprep.subr.bf16.mxu0 0
    %606 = vmatpush1.bf16.msra.mxu0 0
    %607 = vmatprep.subr.bf16.mxu0 0
    %608 = vmatpush1.bf16.msra.mxu0 0
    %609 = vmatprep.subr.bf16.mxu0 0
    %610 = vmatpush1.bf16.msra.mxu0 0
    %611 = vmatprep.mubr.bf16.mxu0 0
    %612 = vmatmul.mubr.bf16.gmra.mrb[0].mxu0 %v549
    %v613 = vpop.f32.mrb[0].mxu0
    %v614 = vadd.f32 0.0, %v613
    %v615 = vpop.f32.mrb[0].mxu0
    %v616 = vpop.f32.mrb[0].mxu0
    %v617 = vadd.f32 0.0, %v616
    %v618 = vpop.f32.mrb[0].mxu0
    %619 = vmatprep.mubr.bf16.mxu0 0
    %620 = vmatmul.mubr.bf16.gmra.mrb[0].mxu0 %v552
    %v621 = vpop.f32.mrb[0].mxu0
    %v622 = vadd.f32 0.0, %v621
    %v623 = vpop.f32.mrb[0].mxu0
    %v624 = vpop.f32.mrb[0].mxu0
    %v625 = vadd.f32 0.0, %v624
    %v626 = vpop.f32.mrb[0].mxu0
    %627 = vmatprep.mubr.bf16.mxu0 0
    %628 = vmatmul.mubr.bf16.gmra.mrb[0].mxu0 %v555
    %v629 = vpop.f32.mrb[0].mxu0
    %v630 = vadd.f32 0.0, %v629
    %v631 = vpop.f32.mrb[0].mxu0
    %v632 = vpop.f32.mrb[0].mxu0
    %v633 = vadd.f32 0.0, %v632
    %v634 = vpop.f32.mrb[0].mxu0
    %635 = vmatprep.mubr.bf16.mxu0 0
    %636 = vmatmul.mubr.bf16.gmra.mrb[0].mxu0 %v558
    %v637 = vpop.f32.mrb[0].mxu0
    %v638 = vadd.f32 0.0, %v637
    %v639 = vpop.f32.mrb[0].mxu0
    %v640 = vpop.f32.mrb[0].mxu0
    %v641 = vadd.f32 0.0, %v640
    %v642 = vpop.f32.mrb[0].mxu0
    %643 = vmatprep.mubr.bf16.mxu0 0
    %644 = vmatmul.mubr.bf16.gmra.mrb[0].mxu0 %v561
    %v645 = vpop.f32.mrb[0].mxu0
    %v646 = vadd.f32 0.0, %v645
    %v647 = vpop.f32.mrb[0].mxu0
    %v648 = vpop.f32.mrb[0].mxu0
    %v649 = vadd.f32 0.0, %v648
    %v650 = vpop.f32.mrb[0].mxu0
    %651 = vmatprep.mubr.bf16.mxu0 0
    %652 = vmatmul.mubr.bf16.gmra.mrb[0].mxu0 %v564
    %v653 = vpop.f32.mrb[0].mxu0
    %v654 = vadd.f32 0.0, %v653
    %v655 = vpop.f32.mrb[0].mxu0
    %v656 = vpop.f32.mrb[0].mxu0
    %v657 = vadd.f32 0.0, %v656
    %v658 = vpop.f32.mrb[0].mxu0
    %659 = vmatprep.mubr.bf16.mxu0 0
    %660 = vmatmul.mubr.bf16.gmra.mrb[0].mxu0 %v567
    %v661 = vpop.f32.mrb[0].mxu0
    %v662 = vadd.f32 0.0, %v661
    %v663 = vpop.f32.mrb[0].mxu0
    %v664 = vpop.f32.mrb[0].mxu0
    %v665 = vadd.f32 0.0, %v664
    %v666 = vpop.f32.mrb[0].mxu0
    %667 = vmatprep.mubr.bf16.mxu0 0
    %668 = vmatmul.mubr.bf16.gmra.mrb[0].mxu0 %v570
    %v669 = vpop.f32.mrb[0].mxu0
    %v670 = vadd.f32 0.0, %v669
    %v671 = vpop.f32.mrb[0].mxu0
    %v672 = vpop.f32.mrb[0].mxu0
    %v673 = vadd.f32 0.0, %v672
    %v674 = vpop.f32.mrb[0].mxu0
    %675 = vmatprep.mubr.bf16.mxu0 0
    %676 = vmatmul.mubr.bf16.gmra.mrb[0].mxu0 %v573
    %v677 = vpop.f32.mrb[0].mxu0
    %v678 = vadd.f32 0.0, %v677
    %v679 = vpop.f32.mrb[0].mxu0
    %v680 = vpop.f32.mrb[0].mxu0
    %v681 = vadd.f32 0.0, %v680
    %v682 = vpop.f32.mrb[0].mxu0
    %683 = vdwg.mxu0
    %v684 = vpack.c.bf16 %v617, %v614
    %v685 = vpack.c.bf16 %v625, %v622
    %v686 = vpack.c.bf16 %v633, %v630
    %v687 = vpack.c.bf16 %v641, %v638
    %v688 = vpack.c.bf16 %v649, %v646
    %v689 = vpack.c.bf16 %v657, %v654
    %v690 = vpack.c.bf16 %v665, %v662
    %v691 = vpack.c.bf16 %v673, %v670
    %v692 = vpack.c.bf16 %v681, %v678
    %693 = vxpose.xlu0.c.b16.start [1/8] %v685, 128
    %694 = vxpose.xlu0.c.b16.cont [2/8] 0, 128
    %695 = vxpose.xlu0.c.b16.cont [3/8] 0, 128
    %696 = vxpose.xlu0.c.b16.cont [4/8] 0, 128
    %697 = vxpose.xlu0.c.b16.cont [5/8] 0, 128
    %698 = vxpose.xlu0.c.b16.cont [6/8] 0, 128
    %699 = vxpose.xlu0.c.b16.cont [7/8] 0, 128
    %700 = vxpose.xlu0.c.b16.end [8/8] 0, 128
    %v701 = vpop.trf.xlu0
    %v702 = vpop.trf.xlu0
    %v703 = vpop.trf.xlu0
    %v704 = vpop.trf.xlu0
    %v705 = vpop.trf.xlu0
    %v706 = vpop.trf.xlu0
    %v707 = vpop.trf.xlu0
    %v708 = vpop.trf.xlu0
    %vm709 = vcmask 130048
    %v711 = vsel %vm709, %v701, 0
    %v714 = vsel %vm709, %v702, 0
    %v717 = vsel %vm709, %v703, 0
    %v720 = vsel %vm709, %v704, 0
    %722 = vmatprep.subr.bf16.mxu0 0
    %723 = vmatpush1.bf16.msra.mxu0 %v684
    %724 = vmatprep.subr.bf16.mxu0 0
    %725 = vmatpush1.bf16.msra.mxu0 0
    %726 = vmatprep.subr.bf16.mxu0 0
    %727 = vmatpush1.bf16.msra.mxu0 0
    %728 = vmatprep.subr.bf16.mxu0 0
    %729 = vmatpush1.bf16.msra.mxu0 0
    %730 = vmatprep.subr.bf16.mxu0 0
    %731 = vmatpush1.bf16.msra.mxu0 0
    %732 = vmatprep.subr.bf16.mxu0 0
    %733 = vmatpush1.bf16.msra.mxu0 0
    %734 = vmatprep.subr.bf16.mxu0 0
    %735 = vmatpush1.bf16.msra.mxu0 0
    %736 = vmatprep.subr.bf16.mxu0 0
    %737 = vmatpush1.bf16.msra.mxu0 0
    %738 = vmatprep.subr.bf16.mxu0 0
    %739 = vmatpush1.bf16.msra.mxu0 0
    %740 = vmatprep.subr.bf16.mxu0 0
    %741 = vmatpush1.bf16.msra.mxu0 0
    %742 = vmatprep.subr.bf16.mxu0 0
    %743 = vmatpush1.bf16.msra.mxu0 0
    %744 = vmatprep.subr.bf16.mxu0 0
    %745 = vmatpush1.bf16.msra.mxu0 0
    %746 = vmatprep.subr.bf16.mxu0 0
    %747 = vmatpush1.bf16.msra.mxu0 0
    %748 = vmatprep.subr.bf16.mxu0 0
    %749 = vmatpush1.bf16.msra.mxu0 0
    %750 = vmatprep.subr.bf16.mxu0 0
    %751 = vmatpush1.bf16.msra.mxu0 0
    %752 = vmatprep.subr.bf16.mxu0 0
    %753 = vmatpush1.bf16.msra.mxu0 0
    %754 = vmatprep.mubr.bf16.mxu0 0
    %755 = vmatmul.mubr.bf16.gmra.mrb[0].mxu0 %v711
    %v756 = vpop.f32.mrb[0].mxu0
    %v757 = vadd.f32 0.0, %v756
    %v758 = vpop.f32.mrb[0].mxu0
    %v759 = vpop.f32.mrb[0].mxu0
    %v760 = vadd.f32 0.0, %v759
    %v761 = vpop.f32.mrb[0].mxu0
    %762 = vmatprep.mubr.bf16.mxu0 0
    %763 = vmatmul.mubr.bf16.gmra.mrb[0].mxu0 %v714
    %v764 = vpop.f32.mrb[0].mxu0
    %v765 = vadd.f32 0.0, %v764
    %v766 = vpop.f32.mrb[0].mxu0
    %v767 = vpop.f32.mrb[0].mxu0
    %v768 = vadd.f32 0.0, %v767
    %v769 = vpop.f32.mrb[0].mxu0
    %770 = vmatprep.mubr.bf16.mxu0 0
    %771 = vmatmul.mubr.bf16.gmra.mrb[0].mxu0 %v717
    %v772 = vpop.f32.mrb[0].mxu0
    %v773 = vadd.f32 0.0, %v772
    %v774 = vpop.f32.mrb[0].mxu0
    %v775 = vpop.f32.mrb[0].mxu0
    %v776 = vadd.f32 0.0, %v775
    %v777 = vpop.f32.mrb[0].mxu0
    %778 = vmatprep.mubr.bf16.mxu0 0
    %779 = vmatmul.mubr.bf16.gmra.mrb[0].mxu0 %v720
    %v780 = vpop.f32.mrb[0].mxu0
    %v781 = vadd.f32 0.0, %v780
    %v782 = vpop.f32.mrb[0].mxu0
    %v783 = vpop.f32.mrb[0].mxu0
    %v784 = vadd.f32 0.0, %v783
    %v785 = vpop.f32.mrb[0].mxu0
    %786 = vdwg.mxu0
    %v787 = vmul.f32 %v757, 0.25
    %v788 = vmul.f32 %v760, 0.25
    %v789 = vmul.f32 %v765, 0.25
    %v790 = vmul.f32 %v768, 0.25
    %v791 = vmul.f32 %v773, 0.25
    %v792 = vmul.f32 %v776, 0.25
    %v793 = vmul.f32 %v781, 0.25
    %v794 = vmul.f32 %v784, 0.25
    %v795 = vxor.u32 %v787, 2147483648
    %v796 = vxor.u32 %v788, 2147483648
    %v797 = vxor.u32 %v789, 2147483648
    %v798 = vxor.u32 %v790, 2147483648
    %v799 = vxor.u32 %v791, 2147483648
    %v800 = vxor.u32 %v792, 2147483648
    %v801 = vxor.u32 %v793, 2147483648
    %v802 = vxor.u32 %v794, 2147483648
    %v803 = vmul.f32 %v795, 1.442695
    %v804 = vpow.pop %v803
    %v805 = vmul.f32 %v796, 1.442695
    %v806 = vpow.pop %v805
    %v807 = vmul.f32 %v797, 1.442695
    %v808 = vpow.pop %v807
    %v809 = vmul.f32 %v798, 1.442695
    %v810 = vpow.pop %v809
    %v811 = vmul.f32 %v799, 1.442695
    %v812 = vpow.pop %v811
    %v813 = vmul.f32 %v800, 1.442695
    %v814 = vpow.pop %v813
    %v815 = vmul.f32 %v801, 1.442695
    %v816 = vpow.pop %v815
    %v817 = vmul.f32 %v802, 1.442695
    %v818 = vpow.pop %v817
    %v819 = vadd.f32 %v804, 1.0
    %v820 = vadd.f32 %v806, 1.0
    %v821 = vadd.f32 %v808, 1.0
    %v822 = vadd.f32 %v810, 1.0
    %v823 = vadd.f32 %v812, 1.0
    %v824 = vadd.f32 %v814, 1.0
    %v825 = vadd.f32 %v816, 1.0
    %v826 = vadd.f32 %v818, 1.0
    %v827 = vrcp.pop %v819
    %v828 = vmul.f32 1.0, %v827
    %v829 = vrcp.pop %v820
    %v830 = vmul.f32 1.0, %v829
    %v831 = vrcp.pop %v821
    %v832 = vmul.f32 1.0, %v831
    %v833 = vrcp.pop %v822
    %v834 = vmul.f32 1.0, %v833
    %v835 = vrcp.pop %v823
    %v836 = vmul.f32 1.0, %v835
    %v837 = vrcp.pop %v824
    %v838 = vmul.f32 1.0, %v837
    %v839 = vrcp.pop %v825
    %v840 = vmul.f32 1.0, %v839
    %v841 = vrcp.pop %v826
    %v842 = vmul.f32 1.0, %v841
    %v843 = vmul.f32 %v828, %v94
    %v844 = vmul.f32 %v830, %v95
    %v845 = vmul.f32 %v832, %v96
    %v846 = vmul.f32 %v834, %v97
    %v847 = vmul.f32 %v836, %v98
    %v848 = vmul.f32 %v838, %v99
    %v849 = vmul.f32 %v840, %v100
    %v850 = vmul.f32 %v842, %v101
    %v851 = vpack.c.bf16 %v844, %v843
    %v852 = vpack.c.bf16 %v846, %v845
    %v853 = vpack.c.bf16 %v848, %v847
    %v854 = vpack.c.bf16 %v850, %v849
    %v856 = vsel %vm135, %v686, 0
    %858 = vmatprep.subr.bf16.mxu0 0
    %859 = vmatpush1.bf16.msra.mxu0 %v851
    %860 = vmatprep.subr.bf16.mxu0 0
    %861 = vmatpush1.bf16.msra.mxu0 %v852
    %862 = vmatprep.subr.bf16.mxu0 0
    %863 = vmatpush1.bf16.msra.mxu0 %v853
    %864 = vmatprep.subr.bf16.mxu0 0
    %865 = vmatpush1.bf16.msra.mxu0 %v854
    %866 = vmatprep.subr.bf16.mxu0 0
    %867 = vmatpush1.bf16.msra.mxu0 0
    %868 = vmatprep.subr.bf16.mxu0 0
    %869 = vmatpush1.bf16.msra.mxu0 0
    %870 = vmatprep.subr.bf16.mxu0 0
    %871 = vmatpush1.bf16.msra.mxu0 0
    %872 = vmatprep.subr.bf16.mxu0 0
    %873 = vmatpush1.bf16.msra.mxu0 0
    %874 = vmatprep.subr.bf16.mxu0 0
    %875 = vmatpush1.bf16.msra.mxu0 0
    %876 = vmatprep.subr.bf16.mxu0 0
    %877 = vmatpush1.bf16.msra.mxu0 0
    %878 = vmatprep.subr.bf16.mxu0 0
    %879 = vmatpush1.bf16.msra.mxu0 0
    %880 = vmatprep.subr.bf16.mxu0 0
    %881 = vmatpush1.bf16.msra.mxu0 0
    %882 = vmatprep.subr.bf16.mxu0 0
    %883 = vmatpush1.bf16.msra.mxu0 0
    %884 = vmatprep.subr.bf16.mxu0 0
    %885 = vmatpush1.bf16.msra.mxu0 0
    %886 = vmatprep.subr.bf16.mxu0 0
    %887 = vmatpush1.bf16.msra.mxu0 0
    %888 = vmatprep.subr.bf16.mxu0 0
    %889 = vmatpush1.bf16.msra.mxu0 0
    %890 = vmatprep.mubr.bf16.mxu0 0
    %891 = vmatmul.mubr.bf16.gmra.mrb[0].mxu0 %v856
    %v892 = vpop.f32.mrb[0].mxu0
    %v893 = vadd.f32 0.0, %v892
    %v894 = vpop.f32.mrb[0].mxu0
    %v895 = vpop.f32.mrb[0].mxu0
    %v896 = vadd.f32 0.0, %v895
    %v897 = vpop.f32.mrb[0].mxu0
    %898 = vdwg.mxu0
    %899 = vxpose.xlu0.c.b16.start [1/8] %v688, 128
    %900 = vxpose.xlu0.c.b16.cont [2/8] 0, 128
    %901 = vxpose.xlu0.c.b16.cont [3/8] 0, 128
    %902 = vxpose.xlu0.c.b16.cont [4/8] 0, 128
    %903 = vxpose.xlu0.c.b16.cont [5/8] 0, 128
    %904 = vxpose.xlu0.c.b16.cont [6/8] 0, 128
    %905 = vxpose.xlu0.c.b16.cont [7/8] 0, 128
    %906 = vxpose.xlu0.c.b16.end [8/8] 0, 128
    %v907 = vpop.trf.xlu0
    %v908 = vpop.trf.xlu0
    %v909 = vpop.trf.xlu0
    %v910 = vpop.trf.xlu0
    %v911 = vpop.trf.xlu0
    %v912 = vpop.trf.xlu0
    %v913 = vpop.trf.xlu0
    %v914 = vpop.trf.xlu0
    %v916 = vsel %vm709, %v907, 0
    %v919 = vsel %vm709, %v908, 0
    %v922 = vsel %vm709, %v909, 0
    %v925 = vsel %vm709, %v910, 0
    %927 = vmatprep.subr.bf16.mxu0 0
    %928 = vmatpush1.bf16.msra.mxu0 %v687
    %929 = vmatprep.subr.bf16.mxu0 0
    %930 = vmatpush1.bf16.msra.mxu0 0
    %931 = vmatprep.subr.bf16.mxu0 0
    %932 = vmatpush1.bf16.msra.mxu0 0
    %933 = vmatprep.subr.bf16.mxu0 0
    %934 = vmatpush1.bf16.msra.mxu0 0
    %935 = vmatprep.subr.bf16.mxu0 0
    %936 = vmatpush1.bf16.msra.mxu0 0
    %937 = vmatprep.subr.bf16.mxu0 0
    %938 = vmatpush1.bf16.msra.mxu0 0
    %939 = vmatprep.subr.bf16.mxu0 0
    %940 = vmatpush1.bf16.msra.mxu0 0
    %941 = vmatprep.subr.bf16.mxu0 0
    %942 = vmatpush1.bf16.msra.mxu0 0
    %943 = vmatprep.subr.bf16.mxu0 0
    %944 = vmatpush1.bf16.msra.mxu0 0
    %945 = vmatprep.subr.bf16.mxu0 0
    %946 = vmatpush1.bf16.msra.mxu0 0
    %947 = vmatprep.subr.bf16.mxu0 0
    %948 = vmatpush1.bf16.msra.mxu0 0
    %949 = vmatprep.subr.bf16.mxu0 0
    %950 = vmatpush1.bf16.msra.mxu0 0
    %951 = vmatprep.subr.bf16.mxu0 0
    %952 = vmatpush1.bf16.msra.mxu0 0
    %953 = vmatprep.subr.bf16.mxu0 0
    %954 = vmatpush1.bf16.msra.mxu0 0
    %955 = vmatprep.subr.bf16.mxu0 0
    %956 = vmatpush1.bf16.msra.mxu0 0
    %957 = vmatprep.subr.bf16.mxu0 0
    %958 = vmatpush1.bf16.msra.mxu0 0
    %959 = vmatprep.mubr.bf16.mxu0 0
    %960 = vmatmul.mubr.bf16.gmra.mrb[0].mxu0 %v916
    %v961 = vpop.f32.mrb[0].mxu0
    %v962 = vadd.f32 0.0, %v961
    %v963 = vpop.f32.mrb[0].mxu0
    %v964 = vpop.f32.mrb[0].mxu0
    %v965 = vadd.f32 0.0, %v964
    %v966 = vpop.f32.mrb[0].mxu0
    %967 = vmatprep.mubr.bf16.mxu0 0
    %968 = vmatmul.mubr.bf16.gmra.mrb[0].mxu0 %v919
    %v969 = vpop.f32.mrb[0].mxu0
    %v970 = vadd.f32 0.0, %v969
    %v971 = vpop.f32.mrb[0].mxu0
    %v972 = vpop.f32.mrb[0].mxu0
    %v973 = vadd.f32 0.0, %v972
    %v974 = vpop.f32.mrb[0].mxu0
    %975 = vmatprep.mubr.bf16.mxu0 0
    %976 = vmatmul.mubr.bf16.gmra.mrb[0].mxu0 %v922
    %v977 = vpop.f32.mrb[0].mxu0
    %v978 = vadd.f32 0.0, %v977
    %v979 = vpop.f32.mrb[0].mxu0
    %v980 = vpop.f32.mrb[0].mxu0
    %v981 = vadd.f32 0.0, %v980
    %v982 = vpop.f32.mrb[0].mxu0
    %983 = vmatprep.mubr.bf16.mxu0 0
    %984 = vmatmul.mubr.bf16.gmra.mrb[0].mxu0 %v925
    %v985 = vpop.f32.mrb[0].mxu0
    %v986 = vadd.f32 0.0, %v985
    %v987 = vpop.f32.mrb[0].mxu0
    %v988 = vpop.f32.mrb[0].mxu0
    %v989 = vadd.f32 0.0, %v988
    %v990 = vpop.f32.mrb[0].mxu0
    %991 = vdwg.mxu0
    %v992 = vmul.f32 %v962, 0.25
    %v993 = vmul.f32 %v965, 0.25
    %v994 = vmul.f32 %v970, 0.25
    %v995 = vmul.f32 %v973, 0.25
    %v996 = vmul.f32 %v978, 0.25
    %v997 = vmul.f32 %v981, 0.25
    %v998 = vmul.f32 %v986, 0.25
    %v999 = vmul.f32 %v989, 0.25
    %v1000 = vxor.u32 %v992, 2147483648
    %v1001 = vxor.u32 %v993, 2147483648
    %v1002 = vxor.u32 %v994, 2147483648
    %v1003 = vxor.u32 %v995, 2147483648
    %v1004 = vxor.u32 %v996, 2147483648
    %v1005 = vxor.u32 %v997, 2147483648
    %v1006 = vxor.u32 %v998, 2147483648
    %v1007 = vxor.u32 %v999, 2147483648
    %v1008 = vmul.f32 %v1000, 1.442695
    %v1009 = vpow.pop %v1008
    %v1010 = vmul.f32 %v1001, 1.442695
    %v1011 = vpow.pop %v1010
    %v1012 = vmul.f32 %v1002, 1.442695
    %v1013 = vpow.pop %v1012
    %v1014 = vmul.f32 %v1003, 1.442695
    %v1015 = vpow.pop %v1014
    %v1016 = vmul.f32 %v1004, 1.442695
    %v1017 = vpow.pop %v1016
    %v1018 = vmul.f32 %v1005, 1.442695
    %v1019 = vpow.pop %v1018
    %v1020 = vmul.f32 %v1006, 1.442695
    %v1021 = vpow.pop %v1020
    %v1022 = vmul.f32 %v1007, 1.442695
    %v1023 = vpow.pop %v1022
    %v1024 = vadd.f32 %v1009, 1.0
    %v1025 = vadd.f32 %v1011, 1.0
    %v1026 = vadd.f32 %v1013, 1.0
    %v1027 = vadd.f32 %v1015, 1.0
    %v1028 = vadd.f32 %v1017, 1.0
    %v1029 = vadd.f32 %v1019, 1.0
    %v1030 = vadd.f32 %v1021, 1.0
    %v1031 = vadd.f32 %v1023, 1.0
    %v1032 = vrcp.pop %v1024
    %v1033 = vmul.f32 1.0, %v1032
    %v1034 = vrcp.pop %v1025
    %v1035 = vmul.f32 1.0, %v1034
    %v1036 = vrcp.pop %v1026
    %v1037 = vmul.f32 1.0, %v1036
    %v1038 = vrcp.pop %v1027
    %v1039 = vmul.f32 1.0, %v1038
    %v1040 = vrcp.pop %v1028
    %v1041 = vmul.f32 1.0, %v1040
    %v1042 = vrcp.pop %v1029
    %v1043 = vmul.f32 1.0, %v1042
    %v1044 = vrcp.pop %v1030
    %v1045 = vmul.f32 1.0, %v1044
    %v1046 = vrcp.pop %v1031
    %v1047 = vmul.f32 1.0, %v1046
    %v1048 = vmul.f32 %v1033, %v94
    %v1049 = vmul.f32 %v1035, %v95
    %v1050 = vmul.f32 %v1037, %v96
    %v1051 = vmul.f32 %v1039, %v97
    %v1052 = vmul.f32 %v1041, %v98
    %v1053 = vmul.f32 %v1043, %v99
    %v1054 = vmul.f32 %v1045, %v100
    %v1055 = vmul.f32 %v1047, %v101
    %v1056 = vpack.c.bf16 %v1049, %v1048
    %v1057 = vpack.c.bf16 %v1051, %v1050
    %v1058 = vpack.c.bf16 %v1053, %v1052
    %v1059 = vpack.c.bf16 %v1055, %v1054
    %v1061 = vsel %vm135, %v689, 0
    %1063 = vmatprep.subr.bf16.mxu0 0
    %1064 = vmatpush1.bf16.msra.mxu0 %v1056
    %1065 = vmatprep.subr.bf16.mxu0 0
    %1066 = vmatpush1.bf16.msra.mxu0 %v1057
    %1067 = vmatprep.subr.bf16.mxu0 0
    %1068 = vmatpush1.bf16.msra.mxu0 %v1058
    %1069 = vmatprep.subr.bf16.mxu0 0
    %1070 = vmatpush1.bf16.msra.mxu0 %v1059
    %1071 = vmatprep.subr.bf16.mxu0 0
    %1072 = vmatpush1.bf16.msra.mxu0 0
    %1073 = vmatprep.subr.bf16.mxu0 0
    %1074 = vmatpush1.bf16.msra.mxu0 0
    %1075 = vmatprep.subr.bf16.mxu0 0
    %1076 = vmatpush1.bf16.msra.mxu0 0
    %1077 = vmatprep.subr.bf16.mxu0 0
    %1078 = vmatpush1.bf16.msra.mxu0 0
    %1079 = vmatprep.subr.bf16.mxu0 0
    %1080 = vmatpush1.bf16.msra.mxu0 0
    %1081 = vmatprep.subr.bf16.mxu0 0
    %1082 = vmatpush1.bf16.msra.mxu0 0
    %1083 = vmatprep.subr.bf16.mxu0 0
    %1084 = vmatpush1.bf16.msra.mxu0 0
    %1085 = vmatprep.subr.bf16.mxu0 0
    %1086 = vmatpush1.bf16.msra.mxu0 0
    %1087 = vmatprep.subr.bf16.mxu0 0
    %1088 = vmatpush1.bf16.msra.mxu0 0
    %1089 = vmatprep.subr.bf16.mxu0 0
    %1090 = vmatpush1.bf16.msra.mxu0 0
    %1091 = vmatprep.subr.bf16.mxu0 0
    %1092 = vmatpush1.bf16.msra.mxu0 0
    %1093 = vmatprep.subr.bf16.mxu0 0
    %1094 = vmatpush1.bf16.msra.mxu0 0
    %1095 = vmatprep.mubr.bf16.mxu0 0
    %1096 = vmatmul.mubr.bf16.gmra.mrb[0].mxu0 %v1061
    %v1097 = vpop.f32.mrb[0].mxu0
    %v1098 = vadd.f32 0.0, %v1097
    %v1099 = vpop.f32.mrb[0].mxu0
    %v1100 = vpop.f32.mrb[0].mxu0
    %v1101 = vadd.f32 0.0, %v1100
    %v1102 = vpop.f32.mrb[0].mxu0
    %1103 = vdwg.mxu0
    %1104 = vxpose.xlu0.c.b16.start [1/8] %v691, 128
    %1105 = vxpose.xlu0.c.b16.cont [2/8] 0, 128
    %1106 = vxpose.xlu0.c.b16.cont [3/8] 0, 128
    %1107 = vxpose.xlu0.c.b16.cont [4/8] 0, 128
    %1108 = vxpose.xlu0.c.b16.cont [5/8] 0, 128
    %1109 = vxpose.xlu0.c.b16.cont [6/8] 0, 128
    %1110 = vxpose.xlu0.c.b16.cont [7/8] 0, 128
    %1111 = vxpose.xlu0.c.b16.end [8/8] 0, 128
    %v1112 = vpop.trf.xlu0
    %v1113 = vpop.trf.xlu0
    %v1114 = vpop.trf.xlu0
    %v1115 = vpop.trf.xlu0
    %v1116 = vpop.trf.xlu0
    %v1117 = vpop.trf.xlu0
    %v1118 = vpop.trf.xlu0
    %v1119 = vpop.trf.xlu0
    %v1121 = vsel %vm709, %v1112, 0
    %v1124 = vsel %vm709, %v1113, 0
    %v1127 = vsel %vm709, %v1114, 0
    %v1130 = vsel %vm709, %v1115, 0
    %1132 = vmatprep.subr.bf16.mxu0 0
    %1133 = vmatpush1.bf16.msra.mxu0 %v690
    %1134 = vmatprep.subr.bf16.mxu0 0
    %1135 = vmatpush1.bf16.msra.mxu0 0
    %1136 = vmatprep.subr.bf16.mxu0 0
    %1137 = vmatpush1.bf16.msra.mxu0 0
    %1138 = vmatprep.subr.bf16.mxu0 0
    %1139 = vmatpush1.bf16.msra.mxu0 0
    %1140 = vmatprep.subr.bf16.mxu0 0
    %1141 = vmatpush1.bf16.msra.mxu0 0
    %1142 = vmatprep.subr.bf16.mxu0 0
    %1143 = vmatpush1.bf16.msra.mxu0 0
    %1144 = vmatprep.subr.bf16.mxu0 0
    %1145 = vmatpush1.bf16.msra.mxu0 0
    %1146 = vmatprep.subr.bf16.mxu0 0
    %1147 = vmatpush1.bf16.msra.mxu0 0
    %1148 = vmatprep.subr.bf16.mxu0 0
    %1149 = vmatpush1.bf16.msra.mxu0 0
    %1150 = vmatprep.subr.bf16.mxu0 0
    %1151 = vmatpush1.bf16.msra.mxu0 0
    %1152 = vmatprep.subr.bf16.mxu0 0
    %1153 = vmatpush1.bf16.msra.mxu0 0
    %1154 = vmatprep.subr.bf16.mxu0 0
    %1155 = vmatpush1.bf16.msra.mxu0 0
    %1156 = vmatprep.subr.bf16.mxu0 0
    %1157 = vmatpush1.bf16.msra.mxu0 0
    %1158 = vmatprep.subr.bf16.mxu0 0
    %1159 = vmatpush1.bf16.msra.mxu0 0
    %1160 = vmatprep.subr.bf16.mxu0 0
    %1161 = vmatpush1.bf16.msra.mxu0 0
    %1162 = vmatprep.subr.bf16.mxu0 0
    %1163 = vmatpush1.bf16.msra.mxu0 0
    %1164 = vmatprep.mubr.bf16.mxu0 0
    %1165 = vmatmul.mubr.bf16.gmra.mrb[0].mxu0 %v1121
    %v1166 = vpop.f32.mrb[0].mxu0
    %v1167 = vadd.f32 0.0, %v1166
    %v1168 = vpop.f32.mrb[0].mxu0
    %v1169 = vpop.f32.mrb[0].mxu0
    %v1170 = vadd.f32 0.0, %v1169
    %v1171 = vpop.f32.mrb[0].mxu0
    %1172 = vmatprep.mubr.bf16.mxu0 0
    %1173 = vmatmul.mubr.bf16.gmra.mrb[0].mxu0 %v1124
    %v1174 = vpop.f32.mrb[0].mxu0
    %v1175 = vadd.f32 0.0, %v1174
    %v1176 = vpop.f32.mrb[0].mxu0
    %v1177 = vpop.f32.mrb[0].mxu0
    %v1178 = vadd.f32 0.0, %v1177
    %v1179 = vpop.f32.mrb[0].mxu0
    %1180 = vmatprep.mubr.bf16.mxu0 0
    %1181 = vmatmul.mubr.bf16.gmra.mrb[0].mxu0 %v1127
    %v1182 = vpop.f32.mrb[0].mxu0
    %v1183 = vadd.f32 0.0, %v1182
    %v1184 = vpop.f32.mrb[0].mxu0
    %v1185 = vpop.f32.mrb[0].mxu0
    %v1186 = vadd.f32 0.0, %v1185
    %v1187 = vpop.f32.mrb[0].mxu0
    %1188 = vmatprep.mubr.bf16.mxu0 0
    %1189 = vmatmul.mubr.bf16.gmra.mrb[0].mxu0 %v1130
    %v1190 = vpop.f32.mrb[0].mxu0
    %v1191 = vadd.f32 0.0, %v1190
    %v1192 = vpop.f32.mrb[0].mxu0
    %v1193 = vpop.f32.mrb[0].mxu0
    %v1194 = vadd.f32 0.0, %v1193
    %v1195 = vpop.f32.mrb[0].mxu0
    %1196 = vdwg.mxu0
    %v1197 = vmul.f32 %v1167, 0.25
    %v1198 = vmul.f32 %v1170, 0.25
    %v1199 = vmul.f32 %v1175, 0.25
    %v1200 = vmul.f32 %v1178, 0.25
    %v1201 = vmul.f32 %v1183, 0.25
    %v1202 = vmul.f32 %v1186, 0.25
    %v1203 = vmul.f32 %v1191, 0.25
    %v1204 = vmul.f32 %v1194, 0.25
    %v1205 = vxor.u32 %v1197, 2147483648
    %v1206 = vxor.u32 %v1198, 2147483648
    %v1207 = vxor.u32 %v1199, 2147483648
    %v1208 = vxor.u32 %v1200, 2147483648
    %v1209 = vxor.u32 %v1201, 2147483648
    %v1210 = vxor.u32 %v1202, 2147483648
    %v1211 = vxor.u32 %v1203, 2147483648
    %v1212 = vxor.u32 %v1204, 2147483648
    %v1213 = vmul.f32 %v1205, 1.442695
    %v1214 = vpow.pop %v1213
    %v1215 = vmul.f32 %v1206, 1.442695
    %v1216 = vpow.pop %v1215
    %v1217 = vmul.f32 %v1207, 1.442695
    %v1218 = vpow.pop %v1217
    %v1219 = vmul.f32 %v1208, 1.442695
    %v1220 = vpow.pop %v1219
    %v1221 = vmul.f32 %v1209, 1.442695
    %v1222 = vpow.pop %v1221
    %v1223 = vmul.f32 %v1210, 1.442695
    %v1224 = vpow.pop %v1223
    %v1225 = vmul.f32 %v1211, 1.442695
    %v1226 = vpow.pop %v1225
    %v1227 = vmul.f32 %v1212, 1.442695
    %v1228 = vpow.pop %v1227
    %v1229 = vadd.f32 %v1214, 1.0
    %v1230 = vadd.f32 %v1216, 1.0
    %v1231 = vadd.f32 %v1218, 1.0
    %v1232 = vadd.f32 %v1220, 1.0
    %v1233 = vadd.f32 %v1222, 1.0
    %v1234 = vadd.f32 %v1224, 1.0
    %v1235 = vadd.f32 %v1226, 1.0
    %v1236 = vadd.f32 %v1228, 1.0
    %v1237 = vrcp.pop %v1229
    %v1238 = vmul.f32 1.0, %v1237
    %v1239 = vrcp.pop %v1230
    %v1240 = vmul.f32 1.0, %v1239
    %v1241 = vrcp.pop %v1231
    %v1242 = vmul.f32 1.0, %v1241
    %v1243 = vrcp.pop %v1232
    %v1244 = vmul.f32 1.0, %v1243
    %v1245 = vrcp.pop %v1233
    %v1246 = vmul.f32 1.0, %v1245
    %v1247 = vrcp.pop %v1234
    %v1248 = vmul.f32 1.0, %v1247
    %v1249 = vrcp.pop %v1235
    %v1250 = vmul.f32 1.0, %v1249
    %v1251 = vrcp.pop %v1236
    %v1252 = vmul.f32 1.0, %v1251
    %v1253 = vmul.f32 %v1238, %v94
    %v1254 = vmul.f32 %v1240, %v95
    %v1255 = vmul.f32 %v1242, %v96
    %v1256 = vmul.f32 %v1244, %v97
    %v1257 = vmul.f32 %v1246, %v98
    %v1258 = vmul.f32 %v1248, %v99
    %v1259 = vmul.f32 %v1250, %v100
    %v1260 = vmul.f32 %v1252, %v101
    %v1261 = vpack.c.bf16 %v1254, %v1253
    %v1262 = vpack.c.bf16 %v1256, %v1255
    %v1263 = vpack.c.bf16 %v1258, %v1257
    %v1264 = vpack.c.bf16 %v1260, %v1259
    %v1266 = vsel %vm135, %v692, 0
    %1268 = vmatprep.subr.bf16.mxu0 0
    %1269 = vmatpush1.bf16.msra.mxu0 %v1261
    %1270 = vmatprep.subr.bf16.mxu0 0
    %1271 = vmatpush1.bf16.msra.mxu0 %v1262
    %1272 = vmatprep.subr.bf16.mxu0 0
    %1273 = vmatpush1.bf16.msra.mxu0 %v1263
    %1274 = vmatprep.subr.bf16.mxu0 0
    %1275 = vmatpush1.bf16.msra.mxu0 %v1264
    %1276 = vmatprep.subr.bf16.mxu0 0
    %1277 = vmatpush1.bf16.msra.mxu0 0
    %1278 = vmatprep.subr.bf16.mxu0 0
    %1279 = vmatpush1.bf16.msra.mxu0 0
    %1280 = vmatprep.subr.bf16.mxu0 0
    %1281 = vmatpush1.bf16.msra.mxu0 0
    %1282 = vmatprep.subr.bf16.mxu0 0
    %1283 = vmatpush1.bf16.msra.mxu0 0
    %1284 = vmatprep.subr.bf16.mxu0 0
    %1285 = vmatpush1.bf16.msra.mxu0 0
    %1286 = vmatprep.subr.bf16.mxu0 0
    %1287 = vmatpush1.bf16.msra.mxu0 0
    %1288 = vmatprep.subr.bf16.mxu0 0
    %1289 = vmatpush1.bf16.msra.mxu0 0
    %1290 = vmatprep.subr.bf16.mxu0 0
    %1291 = vmatpush1.bf16.msra.mxu0 0
    %1292 = vmatprep.subr.bf16.mxu0 0
    %1293 = vmatpush1.bf16.msra.mxu0 0
    %1294 = vmatprep.subr.bf16.mxu0 0
    %1295 = vmatpush1.bf16.msra.mxu0 0
    %1296 = vmatprep.subr.bf16.mxu0 0
    %1297 = vmatpush1.bf16.msra.mxu0 0
    %1298 = vmatprep.subr.bf16.mxu0 0
    %1299 = vmatpush1.bf16.msra.mxu0 0
    %1300 = vmatprep.mubr.bf16.mxu0 0
    %1301 = vmatmul.mubr.bf16.gmra.mrb[0].mxu0 %v1266
    %v1302 = vpop.f32.mrb[0].mxu0
    %v1303 = vadd.f32 0.0, %v1302
    %v1304 = vpop.f32.mrb[0].mxu0
    %v1305 = vpop.f32.mrb[0].mxu0
    %v1306 = vadd.f32 0.0, %v1305
    %v1307 = vpop.f32.mrb[0].mxu0
    %1308 = vdwg.mxu0
    %v1309 = vld [vmem:[%s2] sm:$0xf]
    %v1310 = vld [vmem:[%s2 + $0x4] sm:$0xf]
    %v1311 = vld [vmem:[%s2 + $0x8] sm:$0xf]
    %v1312 = vld [vmem:[%s2 + $0xc] sm:$0xf]
    %v1313 = vld [vmem:[%s2 + $0x10] sm:$0xf]
    %v1314 = vld [vmem:[%s2 + $0x14] sm:$0xf]
    %v1315 = vpack.c.bf16 %v896, %v893
    %v1316 = vpack.c.bf16 %v1101, %v1098
    %v1317 = vpack.c.bf16 %v1306, %v1303
    %v1318 = vpack.c.bf16 %v56, %v56
    %v1325 = vunpack.c.l.b16 %v1309
    %v1326 = vunpack.c.l.b16 %v1310
    %v1327 = vunpack.c.l.b16 %v1311
    %v1328 = vunpack.c.l.b16 %v1312
    %v1329 = vunpack.c.l.b16 %v1313
    %v1330 = vunpack.c.l.b16 %v1314
    %v1331 = vpack.c.b16 %v1326, %v1325
    %v1332 = vpack.c.b16 %v1328, %v1327
    %v1333 = vpack.c.b16 %v1330, %v1329
    %v1335 = vsel %vm547, %v1331, 0
    %v1338 = vsel %vm547, %v1332, 0
    %v1341 = vsel %vm547, %v1333, 0
    %v1344 = vsel %vm575, %v1318, 0
    %1346 = vmatprep.subr.bf16.mxu0 0
    %1347 = vmatpush1.bf16.msra.mxu0 %v1315
    %1348 = vmatprep.subr.bf16.mxu0 0
    %1349 = vmatpush1.bf16.msra.mxu0 %v1316
    %1350 = vmatprep.subr.bf16.mxu0 0
    %1351 = vmatpush1.bf16.msra.mxu0 %v1317
    %1352 = vmatprep.subr.bf16.mxu0 0
    %1353 = vmatpush1.bf16.msra.mxu0 %v1344
    %1354 = vmatprep.subr.bf16.mxu0 0
    %1355 = vmatpush1.bf16.msra.mxu0 0
    %1356 = vmatprep.subr.bf16.mxu0 0
    %1357 = vmatpush1.bf16.msra.mxu0 0
    %1358 = vmatprep.subr.bf16.mxu0 0
    %1359 = vmatpush1.bf16.msra.mxu0 0
    %1360 = vmatprep.subr.bf16.mxu0 0
    %1361 = vmatpush1.bf16.msra.mxu0 0
    %1362 = vmatprep.subr.bf16.mxu0 0
    %1363 = vmatpush1.bf16.msra.mxu0 0
    %1364 = vmatprep.subr.bf16.mxu0 0
    %1365 = vmatpush1.bf16.msra.mxu0 0
    %1366 = vmatprep.subr.bf16.mxu0 0
    %1367 = vmatpush1.bf16.msra.mxu0 0
    %1368 = vmatprep.subr.bf16.mxu0 0
    %1369 = vmatpush1.bf16.msra.mxu0 0
    %1370 = vmatprep.subr.bf16.mxu0 0
    %1371 = vmatpush1.bf16.msra.mxu0 0
    %1372 = vmatprep.subr.bf16.mxu0 0
    %1373 = vmatpush1.bf16.msra.mxu0 0
    %1374 = vmatprep.subr.bf16.mxu0 0
    %1375 = vmatpush1.bf16.msra.mxu0 0
    %1376 = vmatprep.subr.bf16.mxu0 0
    %1377 = vmatpush1.bf16.msra.mxu0 0
    %1378 = vmatprep.mubr.bf16.mxu0 0
    %1379 = vmatmul.mubr.bf16.gmra.mrb[0].mxu0 %v1335
    %v1380 = vpop.f32.mrb[0].mxu0
    %v1381 = vadd.f32 0.0, %v1380
    %v1382 = vpop.f32.mrb[0].mxu0
    %v1383 = vpop.f32.mrb[0].mxu0
    %v1384 = vadd.f32 0.0, %v1383
    %v1385 = vpop.f32.mrb[0].mxu0
    %1386 = vmatprep.mubr.bf16.mxu0 0
    %1387 = vmatmul.mubr.bf16.gmra.mrb[0].mxu0 %v1338
    %v1388 = vpop.f32.mrb[0].mxu0
    %v1389 = vadd.f32 0.0, %v1388
    %v1390 = vpop.f32.mrb[0].mxu0
    %v1391 = vpop.f32.mrb[0].mxu0
    %v1392 = vadd.f32 0.0, %v1391
    %v1393 = vpop.f32.mrb[0].mxu0
    %1394 = vmatprep.mubr.bf16.mxu0 0
    %1395 = vmatmul.mubr.bf16.gmra.mrb[0].mxu0 %v1341
    %v1396 = vpop.f32.mrb[0].mxu0
    %v1397 = vadd.f32 0.0, %v1396
    %v1398 = vpop.f32.mrb[0].mxu0
    %v1399 = vpop.f32.mrb[0].mxu0
    %v1400 = vadd.f32 0.0, %v1399
    %v1401 = vpop.f32.mrb[0].mxu0
    %1402 = vdwg.mxu0
    %v1403 = vmul.f32 %v1381, %v57
    %v1404 = vmul.f32 %v1384, %v57
    %v1405 = vmul.f32 %v1389, %v58
    %v1406 = vmul.f32 %v1392, %v58
    %v1407 = vmul.f32 %v1397, %v59
    %v1408 = vmul.f32 %v1400, %v59
    %v1410 = vsel %vm135, %v1403, 0
    %v1413 = vsel %vm135, %v1404, 0
    %v1416 = vsel %vm135, %v1405, 0
    %v1419 = vsel %vm135, %v1406, 0
    %v1422 = vsel %vm135, %v1407, 0
    %v1425 = vsel %vm135, %v1408, 0
    %1427 = vmatprep.subr.mxu0 0.0
    %1428 = vmatpush1.msra.mxu0 %v118
    %1429 = vmatprep.subr.mxu0 0.0
    %1430 = vmatpush1.msra.mxu0 %v119
    %1431 = vmatprep.subr.mxu0 0.0
    %1432 = vmatpush1.msra.mxu0 %v120
    %1433 = vmatprep.subr.mxu0 0.0
    %1434 = vmatpush1.msra.mxu0 %v121
    %1435 = vmatprep.subr.mxu0 0.0
    %1436 = vmatpush1.msra.mxu0 %v122
    %1437 = vmatprep.subr.mxu0 0.0
    %1438 = vmatpush1.msra.mxu0 %v123
    %1439 = vmatprep.subr.mxu0 0.0
    %1440 = vmatpush1.msra.mxu0 %v124
    %1441 = vmatprep.subr.mxu0 0.0
    %1442 = vmatpush1.msra.mxu0 %v125
    %1443 = vmatprep.subr.mxu0 0.0
    %1444 = vmatpush1.msra.mxu0 0.0
    %1445 = vmatprep.subr.mxu0 0.0
    %1446 = vmatpush1.msra.mxu0 0.0
    %1447 = vmatprep.subr.mxu0 0.0
    %1448 = vmatpush1.msra.mxu0 0.0
    %1449 = vmatprep.subr.mxu0 0.0
    %1450 = vmatpush1.msra.mxu0 0.0
    %1451 = vmatprep.subr.mxu0 0.0
    %1452 = vmatpush1.msra.mxu0 0.0
    %1453 = vmatprep.subr.mxu0 0.0
    %1454 = vmatpush1.msra.mxu0 0.0
    %1455 = vmatprep.subr.mxu0 0.0
    %1456 = vmatpush1.msra.mxu0 0.0
    %1457 = vmatprep.subr.mxu0 0.0
    %1458 = vmatpush1.msra.mxu0 0.0
    %1459 = vmatprep.subr.mxu0 0.0
    %1460 = vmatpush1.msra.mxu0 0.0
    %1461 = vmatprep.subr.mxu0 0.0
    %1462 = vmatpush1.msra.mxu0 0.0
    %1463 = vmatprep.subr.mxu0 0.0
    %1464 = vmatpush1.msra.mxu0 0.0
    %1465 = vmatprep.subr.mxu0 0.0
    %1466 = vmatpush1.msra.mxu0 0.0
    %1467 = vmatprep.subr.mxu0 0.0
    %1468 = vmatpush1.msra.mxu0 0.0
    %1469 = vmatprep.subr.mxu0 0.0
    %1470 = vmatpush1.msra.mxu0 0.0
    %1471 = vmatprep.subr.mxu0 0.0
    %1472 = vmatpush1.msra.mxu0 0.0
    %1473 = vmatprep.subr.mxu0 0.0
    %1474 = vmatpush1.msra.mxu0 0.0
    %1475 = vmatprep.subr.mxu0 0.0
    %1476 = vmatpush1.msra.mxu0 0.0
    %1477 = vmatprep.subr.mxu0 0.0
    %1478 = vmatpush1.msra.mxu0 0.0
    %1479 = vmatprep.subr.mxu0 0.0
    %1480 = vmatpush1.msra.mxu0 0.0
    %1481 = vmatprep.subr.mxu0 0.0
    %1482 = vmatpush1.msra.mxu0 0.0
    %1483 = vmatprep.subr.mxu0 0.0
    %1484 = vmatpush1.msra.mxu0 0.0
    %1485 = vmatprep.subr.mxu0 0.0
    %1486 = vmatpush1.msra.mxu0 0.0
    %1487 = vmatprep.subr.mxu0 0.0
    %1488 = vmatpush1.msra.mxu0 0.0
    %1489 = vmatprep.subr.mxu0 0.0
    %1490 = vmatpush1.msra.mxu0 0.0
    %1491 = vmatprep.mubr.f32.mxu0 0.0
    %1492 = vmatmul.mubr.f32.gmra.mrb[0].mxu0 %v1410
    %v1493 = vpop.f32.mrb[0].mxu0
    %v1494 = vadd.f32 0.0, %v1493
    %v1495 = vpop.f32.mrb[0].mxu0
    %1496 = vmatprep.mubr.f32.mxu0 0.0
    %1497 = vmatmul.mubr.f32.gmra.mrb[0].mxu0 %v1413
    %v1498 = vpop.f32.mrb[0].mxu0
    %v1499 = vadd.f32 0.0, %v1498
    %v1500 = vpop.f32.mrb[0].mxu0
    %1501 = vmatprep.mubr.f32.mxu0 0.0
    %1502 = vmatmul.mubr.f32.gmra.mrb[0].mxu0 %v1416
    %v1503 = vpop.f32.mrb[0].mxu0
    %v1504 = vadd.f32 0.0, %v1503
    %v1505 = vpop.f32.mrb[0].mxu0
    %1506 = vmatprep.mubr.f32.mxu0 0.0
    %1507 = vmatmul.mubr.f32.gmra.mrb[0].mxu0 %v1419
    %v1508 = vpop.f32.mrb[0].mxu0
    %v1509 = vadd.f32 0.0, %v1508
    %v1510 = vpop.f32.mrb[0].mxu0
    %1511 = vmatprep.mubr.f32.mxu0 0.0
    %1512 = vmatmul.mubr.f32.gmra.mrb[0].mxu0 %v1422
    %v1513 = vpop.f32.mrb[0].mxu0
    %v1514 = vadd.f32 0.0, %v1513
    %v1515 = vpop.f32.mrb[0].mxu0
    %1516 = vmatprep.mubr.f32.mxu0 0.0
    %1517 = vmatmul.mubr.f32.gmra.mrb[0].mxu0 %v1425
    %v1518 = vpop.f32.mrb[0].mxu0
    %v1519 = vadd.f32 0.0, %v1518
    %v1520 = vpop.f32.mrb[0].mxu0
    %1521 = vdwg.mxu0
    %v1522 = vmax.f32 %v1494, 0.0
    %v1523 = vmax.f32 %v1499, 0.0
    %v1524 = vmax.f32 %v1504, 0.0
    %v1525 = vmax.f32 %v1509, 0.0
    %v1526 = vmax.f32 %v1514, 0.0
    %v1527 = vmax.f32 %v1519, 0.0
    %v1528 = vld [vmem:[%s4] sm:$0xff]
    %v1529 = vld [vmem:[%s4 + $0x8] sm:$0xff]
    %1531 = vset.pattern.permute.xlu0 48
    %1532 = vperm.xlu0 %1531, %v1528
    %v1533 = vpop.permute.xlu0 %1532
    %vm1535 = vcmask 392192
    %v1536 = vsel %vm1535, %v1528, 0
    %1538 = vmatprep.subr.mxu0 0.0
    %1539 = vmatpush1.msra.mxu0 %v1522
    %1540 = vmatprep.subr.mxu0 0.0
    %1541 = vmatpush1.msra.mxu0 %v1523
    %1542 = vmatprep.subr.mxu0 0.0
    %1543 = vmatpush1.msra.mxu0 %v1524
    %1544 = vmatprep.subr.mxu0 0.0
    %1545 = vmatpush1.msra.mxu0 %v1525
    %1546 = vmatprep.subr.mxu0 0.0
    %1547 = vmatpush1.msra.mxu0 %v1526
    %1548 = vmatprep.subr.mxu0 0.0
    %1549 = vmatpush1.msra.mxu0 %v1527
    %1550 = vmatprep.subr.mxu0 0.0
    %1551 = vmatpush1.msra.mxu0 0.0
    %1552 = vmatprep.subr.mxu0 0.0
    %1553 = vmatpush1.msra.mxu0 0.0
    %1554 = vmatprep.subr.mxu0 0.0
    %1555 = vmatpush1.msra.mxu0 0.0
    %1556 = vmatprep.subr.mxu0 0.0
    %1557 = vmatpush1.msra.mxu0 0.0
    %1558 = vmatprep.subr.mxu0 0.0
    %1559 = vmatpush1.msra.mxu0 0.0
    %1560 = vmatprep.subr.mxu0 0.0
    %1561 = vmatpush1.msra.mxu0 0.0
    %1562 = vmatprep.subr.mxu0 0.0
    %1563 = vmatpush1.msra.mxu0 0.0
    %1564 = vmatprep.subr.mxu0 0.0
    %1565 = vmatpush1.msra.mxu0 0.0
    %1566 = vmatprep.subr.mxu0 0.0
    %1567 = vmatpush1.msra.mxu0 0.0
    %1568 = vmatprep.subr.mxu0 0.0
    %1569 = vmatpush1.msra.mxu0 0.0
    %1570 = vmatprep.subr.mxu0 0.0
    %1571 = vmatpush1.msra.mxu0 0.0
    %1572 = vmatprep.subr.mxu0 0.0
    %1573 = vmatpush1.msra.mxu0 0.0
    %1574 = vmatprep.subr.mxu0 0.0
    %1575 = vmatpush1.msra.mxu0 0.0
    %1576 = vmatprep.subr.mxu0 0.0
    %1577 = vmatpush1.msra.mxu0 0.0
    %1578 = vmatprep.subr.mxu0 0.0
    %1579 = vmatpush1.msra.mxu0 0.0
    %1580 = vmatprep.subr.mxu0 0.0
    %1581 = vmatpush1.msra.mxu0 0.0
    %1582 = vmatprep.subr.mxu0 0.0
    %1583 = vmatpush1.msra.mxu0 0.0
    %1584 = vmatprep.subr.mxu0 0.0
    %1585 = vmatpush1.msra.mxu0 0.0
    %1586 = vmatprep.subr.mxu0 0.0
    %1587 = vmatpush1.msra.mxu0 0.0
    %1588 = vmatprep.subr.mxu0 0.0
    %1589 = vmatpush1.msra.mxu0 0.0
    %1590 = vmatprep.subr.mxu0 0.0
    %1591 = vmatpush1.msra.mxu0 0.0
    %1592 = vmatprep.subr.mxu0 0.0
    %1593 = vmatpush1.msra.mxu0 0.0
    %1594 = vmatprep.subr.mxu0 0.0
    %1595 = vmatpush1.msra.mxu0 0.0
    %1596 = vmatprep.subr.mxu0 0.0
    %1597 = vmatpush1.msra.mxu0 0.0
    %1598 = vmatprep.subr.mxu0 0.0
    %1599 = vmatpush1.msra.mxu0 0.0
    %1600 = vmatprep.subr.mxu0 0.0
    %1601 = vmatpush1.msra.mxu0 0.0
    %1602 = vmatprep.mubr.f32.mxu0 0.0
    %1603 = vmatmul.mubr.f32.gmra.mrb[0].mxu0 %v1536
    %v1604 = vpop.f32.mrb[0].mxu0
    %v1605 = vadd.f32 %v1533, %v1604
    %v1606 = vpop.f32.mrb[0].mxu0
    %1607 = vdwg.mxu0
    %v1608 = vmax.f32 %v1605, 0.0
    %1609 = vset.pattern.permute.xlu0 57
    %1610 = vperm.xlu0 %1609, %v1528
    %v1611 = vpop.permute.xlu0 %1610
    %1614 = vset.pattern.permute.xlu0 57
    %1615 = vperm.xlu0 %1614, %v1529
    %v1616 = vpop.permute.xlu0 %1615
    %1618 = vrot.lane.b32.xlu0 %v1528, 79
    %v1619 = vpop.permute.xlu0 %1618
    %1620 = vrot.lane.b32.xlu0 %v1529, 79
    %v1621 = vpop.permute.xlu0 %1620
    %vm1622 = vcmask 64512
    %v1623 = vsel %vm1622, %v1619, 0
    %v1625 = vsel %vm1622, %v1621, 0
    %1627 = vmatprep.subr.mxu0 0.0
    %1628 = vmatpush1.msra.mxu0 %v1608
    %1629 = vmatprep.subr.mxu0 0.0
    %1630 = vmatpush1.msra.mxu0 0.0
    %1631 = vmatprep.subr.mxu0 0.0
    %1632 = vmatpush1.msra.mxu0 0.0
    %1633 = vmatprep.subr.mxu0 0.0
    %1634 = vmatpush1.msra.mxu0 0.0
    %1635 = vmatprep.subr.mxu0 0.0
    %1636 = vmatpush1.msra.mxu0 0.0
    %1637 = vmatprep.subr.mxu0 0.0
    %1638 = vmatpush1.msra.mxu0 0.0
    %1639 = vmatprep.subr.mxu0 0.0
    %1640 = vmatpush1.msra.mxu0 0.0
    %1641 = vmatprep.subr.mxu0 0.0
    %1642 = vmatpush1.msra.mxu0 0.0
    %1643 = vmatprep.subr.mxu0 0.0
    %1644 = vmatpush1.msra.mxu0 0.0
    %1645 = vmatprep.subr.mxu0 0.0
    %1646 = vmatpush1.msra.mxu0 0.0
    %1647 = vmatprep.subr.mxu0 0.0
    %1648 = vmatpush1.msra.mxu0 0.0
    %1649 = vmatprep.subr.mxu0 0.0
    %1650 = vmatpush1.msra.mxu0 0.0
    %1651 = vmatprep.subr.mxu0 0.0
    %1652 = vmatpush1.msra.mxu0 0.0
    %1653 = vmatprep.subr.mxu0 0.0
    %1654 = vmatpush1.msra.mxu0 0.0
    %1655 = vmatprep.subr.mxu0 0.0
    %1656 = vmatpush1.msra.mxu0 0.0
    %1657 = vmatprep.subr.mxu0 0.0
    %1658 = vmatpush1.msra.mxu0 0.0
    %1659 = vmatprep.subr.mxu0 0.0
    %1660 = vmatpush1.msra.mxu0 0.0
    %1661 = vmatprep.subr.mxu0 0.0
    %1662 = vmatpush1.msra.mxu0 0.0
    %1663 = vmatprep.subr.mxu0 0.0
    %1664 = vmatpush1.msra.mxu0 0.0
    %1665 = vmatprep.subr.mxu0 0.0
    %1666 = vmatpush1.msra.mxu0 0.0
    %1667 = vmatprep.subr.mxu0 0.0
    %1668 = vmatpush1.msra.mxu0 0.0
    %1669 = vmatprep.subr.mxu0 0.0
    %1670 = vmatpush1.msra.mxu0 0.0
    %1671 = vmatprep.subr.mxu0 0.0
    %1672 = vmatpush1.msra.mxu0 0.0
    %1673 = vmatprep.subr.mxu0 0.0
    %1674 = vmatpush1.msra.mxu0 0.0
    %1675 = vmatprep.subr.mxu0 0.0
    %1676 = vmatpush1.msra.mxu0 0.0
    %1677 = vmatprep.subr.mxu0 0.0
    %1678 = vmatpush1.msra.mxu0 0.0
    %1679 = vmatprep.subr.mxu0 0.0
    %1680 = vmatpush1.msra.mxu0 0.0
    %1681 = vmatprep.subr.mxu0 0.0
    %1682 = vmatpush1.msra.mxu0 0.0
    %1683 = vmatprep.subr.mxu0 0.0
    %1684 = vmatpush1.msra.mxu0 0.0
    %1685 = vmatprep.subr.mxu0 0.0
    %1686 = vmatpush1.msra.mxu0 0.0
    %1687 = vmatprep.subr.mxu0 0.0
    %1688 = vmatpush1.msra.mxu0 0.0
    %1689 = vmatprep.subr.mxu0 0.0
    %1690 = vmatpush1.msra.mxu0 0.0
    %1691 = vmatprep.mubr.f32.mxu0 0.0
    %1692 = vmatmul.mubr.f32.gmra.mrb[0].mxu0 %v1623
    %v1693 = vpop.f32.mrb[0].mxu0
    %v1694 = vadd.f32 %v1611, %v1693
    %v1695 = vpop.f32.mrb[0].mxu0
    %1696 = vmatprep.mubr.f32.mxu0 0.0
    %1697 = vmatmul.mubr.f32.gmra.mrb[0].mxu0 %v1625
    %v1698 = vpop.f32.mrb[0].mxu0
    %v1699 = vadd.f32 %v1616, %v1698
    %v1700 = vpop.f32.mrb[0].mxu0
    %1701 = vdwg.mxu0
    %v1702 = vxor.u32 %v1694, 2147483648
    %v1703 = vxor.u32 %v1699, 2147483648
    %v1704 = vmul.f32 %v1702, 1.442695
    %v1705 = vpow.pop %v1704
    %v1706 = vmul.f32 %v1703, 1.442695
    %v1707 = vpow.pop %v1706
    %v1708 = vadd.f32 %v1705, 1.0
    %v1709 = vadd.f32 %v1707, 1.0
    %v1710 = vrcp.pop %v1708
    %v1711 = vmul.f32 1.0, %v1710
    %v1712 = vrcp.pop %v1709
    %v1713 = vmul.f32 1.0, %v1712
    %vm1714 = vcmask 15360
    %v1716 = vsel %vm1714, %v1711, 0
    %v1719 = vsel %vm1714, %v1713, 0
    %v1722 = vsel %vm52, %v128, 0
    %1724 = vmatprep.subr.mxu0 0.0
    %1725 = vmatpush1.msra.mxu0 %v1722
    %1726 = vmatprep.subr.mxu0 0.0
    %1727 = vmatpush1.msra.mxu0 0.0
    %1728 = vmatprep.subr.mxu0 0.0
    %1729 = vmatpush1.msra.mxu0 0.0
    %1730 = vmatprep.subr.mxu0 0.0
    %1731 = vmatpush1.msra.mxu0 0.0
    %1732 = vmatprep.subr.mxu0 0.0
    %1733 = vmatpush1.msra.mxu0 0.0
    %1734 = vmatprep.subr.mxu0 0.0
    %1735 = vmatpush1.msra.mxu0 0.0
    %1736 = vmatprep.subr.mxu0 0.0
    %1737 = vmatpush1.msra.mxu0 0.0
    %1738 = vmatprep.subr.mxu0 0.0
    %1739 = vmatpush1.msra.mxu0 0.0
    %1740 = vmatprep.subr.mxu0 0.0
    %1741 = vmatpush1.msra.mxu0 0.0
    %1742 = vmatprep.subr.mxu0 0.0
    %1743 = vmatpush1.msra.mxu0 0.0
    %1744 = vmatprep.subr.mxu0 0.0
    %1745 = vmatpush1.msra.mxu0 0.0
    %1746 = vmatprep.subr.mxu0 0.0
    %1747 = vmatpush1.msra.mxu0 0.0
    %1748 = vmatprep.subr.mxu0 0.0
    %1749 = vmatpush1.msra.mxu0 0.0
    %1750 = vmatprep.subr.mxu0 0.0
    %1751 = vmatpush1.msra.mxu0 0.0
    %1752 = vmatprep.subr.mxu0 0.0
    %1753 = vmatpush1.msra.mxu0 0.0
    %1754 = vmatprep.subr.mxu0 0.0
    %1755 = vmatpush1.msra.mxu0 0.0
    %1756 = vmatprep.subr.mxu0 0.0
    %1757 = vmatpush1.msra.mxu0 0.0
    %1758 = vmatprep.subr.mxu0 0.0
    %1759 = vmatpush1.msra.mxu0 0.0
    %1760 = vmatprep.subr.mxu0 0.0
    %1761 = vmatpush1.msra.mxu0 0.0
    %1762 = vmatprep.subr.mxu0 0.0
    %1763 = vmatpush1.msra.mxu0 0.0
    %1764 = vmatprep.subr.mxu0 0.0
    %1765 = vmatpush1.msra.mxu0 0.0
    %1766 = vmatprep.subr.mxu0 0.0
    %1767 = vmatpush1.msra.mxu0 0.0
    %1768 = vmatprep.subr.mxu0 0.0
    %1769 = vmatpush1.msra.mxu0 0.0
    %1770 = vmatprep.subr.mxu0 0.0
    %1771 = vmatpush1.msra.mxu0 0.0
    %1772 = vmatprep.subr.mxu0 0.0
    %1773 = vmatpush1.msra.mxu0 0.0
    %1774 = vmatprep.subr.mxu0 0.0
    %1775 = vmatpush1.msra.mxu0 0.0
    %1776 = vmatprep.subr.mxu0 0.0
    %1777 = vmatpush1.msra.mxu0 0.0
    %1778 = vmatprep.subr.mxu0 0.0
    %1779 = vmatpush1.msra.mxu0 0.0
    %1780 = vmatprep.subr.mxu0 0.0
    %1781 = vmatpush1.msra.mxu0 0.0
    %1782 = vmatprep.subr.mxu0 0.0
    %1783 = vmatpush1.msra.mxu0 0.0
    %1784 = vmatprep.subr.mxu0 0.0
    %1785 = vmatpush1.msra.mxu0 0.0
    %1786 = vmatprep.subr.mxu0 0.0
    %1787 = vmatpush1.msra.mxu0 0.0
    %1788 = vmatprep.mubr.f32.mxu0 0.0
    %1789 = vmatmul.mubr.f32.gmra.mrb[0].mxu0 %v1716
    %v1790 = vpop.f32.mrb[0].mxu0
    %v1791 = vadd.f32 0.0, %v1790
    %v1792 = vpop.f32.mrb[0].mxu0
    %1793 = vmatprep.mubr.f32.mxu0 0.0
    %1794 = vmatmul.mubr.f32.gmra.mrb[0].mxu0 %v1719
    %v1795 = vpop.f32.mrb[0].mxu0
    %v1796 = vadd.f32 0.0, %v1795
    %v1797 = vpop.f32.mrb[0].mxu0
    %1798 = vdwg.mxu0
    %v1799 = vmul.f32 %v36, %v1791
    %v1800 = vmul.f32 %v37, %v1796
    %1801 = vst.msk [vmem:[#allocation5] sm:$0xff] %vm135, %v1799
    %1802 = vst.msk [vmem:[#allocation5 + $0x8] sm:$0xff] %vm135, %v1800
    // Predicated region
    $region26: #{tpu_custom_call.1} parent=1 // pred_check
      _
    $region27: #{tpu_custom_call.1} parent=1 // pred_check_branch
      %1804 = sbr.rel (0) target = $region29
    $region28: #{tpu_custom_call.1} parent=1 // pred_region
      %s1806 = ssub.s32 256, 256
      %1807 = vsyncadd [#allocation4], %s1806
      %s1808 = sshll.u32 [#allocation5], 4
      %s1809 = int_to_ptr.vmem [resolvable:$true] %s1808
      %1814 = dma.vmem_to_hbm [thread:$0]  %s1809, 256, %s5, [#allocation4], 128, 128, 8
    $region29: #{tpu_custom_call.1} parent=1 // pred_fallthru
      _
    // Predicated region
    $region30: #{tpu_custom_call.1} parent=1 // pred_check
      _
    $region31: #{tpu_custom_call.1} parent=1 // pred_check_branch
      %1816 = sbr.rel (0) target = $region33
    $region32: #{tpu_custom_call.1} parent=1 // pred_region
      %1817 = dma.done [#allocation4], 256
    $region33: #{tpu_custom_call.1} parent=1 // pred_fallthru
      _
    %1818 = vsyncpa [#allocation3], 1
    %1819 = vsyncpa [#allocation4], 1

</llo_original>
